<compile_context>
chip_gen: v7x
topology: tpu7x:2x2x1
jax: 0.10.0
libtpu: 0.0.40
codegen_flags: <defaults>
</compile_context>

<pallas_src>
import jax
import jax.numpy as jnp
from jax.experimental import pallas as pl
from jax.experimental.pallas import tpu as pltpu

LEAKY_SLOPE = 0.01   # nn.LeakyReLU default negative_slope
BN_EPS = 1e-5        # nn.BatchNorm1d default eps
LANE = 128
SUBLANE = 8


def _leaky_relu(x):
    return jnp.where(x > 0, x, LEAKY_SLOPE * x)


def _round_up(n, m):
    return ((n + m - 1) // m) * m


# ---------------------------------------------------------------------------
# Kernel: one batch tile -> full fused MLP (3 matmuls, BN already folded).
# ---------------------------------------------------------------------------
def mlp_kernel(x_ref, w1_ref, b1_ref, w2_ref, b2_ref, w3_ref, b3_ref, o_ref):
    # x arrives f32 (no separate wrapper-side pad/cast pass); cast in-kernel.
    x = x_ref[...].astype(jnp.bfloat16)                     # [tb, F]

    h = jnp.dot(x, w1_ref[...], preferred_element_type=jnp.float32)
    h = _leaky_relu(h + b1_ref[...]).astype(jnp.bfloat16)   # bf16 intermediate

    h = jnp.dot(h, w2_ref[...], preferred_element_type=jnp.float32)
    h = _leaky_relu(h + b2_ref[...]).astype(jnp.bfloat16)   # bf16 intermediate

    h = jnp.dot(h, w3_ref[...], preferred_element_type=jnp.float32)
    o_ref[...] = (h + b3_ref[...]).astype(o_ref.dtype)      # f32 [tb, Tp]


# ---------------------------------------------------------------------------
# VMEM cap (generation aware; v7x has 64 MiB per TensorCore).
# ---------------------------------------------------------------------------
def _vmem_cap_bytes():
    try:
        phys = int(pltpu.get_tpu_info().vmem_capacity_bytes)
    except Exception:
        phys = 64 << 20      # assume smallest (v7x per-TC) if query unavailable
    return (phys * 4) // 5   # ~20% headroom


# ---------------------------------------------------------------------------
# Wrapper: tile the batch, stream x, keep weights VMEM-resident.
# ---------------------------------------------------------------------------
def model_simple_forward(x, prep, *, tile_b=1024):
    """x: [B, F] float32.  prep: output of prepare_params() (padded bf16)."""
    B, F = x.shape
    assert F == prep["num_features"], "feature dim mismatch"
    T = prep["num_targets"]
    w1p, b1p = prep["w1"], prep["b1"]
    w2p, b2p = prep["w2"], prep["b2"]
    w3p, b3p = prep["w3"], prep["b3"]
    H1p, H2p, Tp = w1p.shape[1], w2p.shape[1], w3p.shape[1]

    # ---- batch tiling (padding bounded by SUBLANE; ragged last tile OK) ----
    b_ceil8 = _round_up(B, SUBLANE)
    tile_b = max(SUBLANE, _round_up(min(tile_b, b_ceil8), SUBLANE))
    # Keep the grid at >= 2 steps when B > SUBLANE so the "parallel" batch
    # axis can be sharded across both TensorCores on v7x (harmless on v5e/v6e).
    if b_ceil8 > SUBLANE:
        tile_b = min(tile_b, _round_up(-(-B // 2), SUBLANE))

    cap = _vmem_cap_bytes()

    def vmem_estimate(tb):
        return (2 * tb * (F * 4 + Tp * 4)                    # streamed x/out tiles
                + 2 * (F * H1p + H1p * H2p + H2p * Tp) * 2   # bf16 weights (worst case 2 bufs)
                + 2 * (H1p + H2p + Tp) * 4                   # biases
                + 3 * tb * max(H1p, H2p) * 4                 # live f32/bf16 intermediates
                + (4 << 20))                                 # headroom

    while tile_b > SUBLANE and vmem_estimate(tile_b) > cap:
        tile_b = max(SUBLANE, _round_up(tile_b // 2, SUBLANE))

    grid_b = -(-B // tile_b)   # ceil-div; final partial tile is masked by Pallas
    vmem_bytes = int(min(vmem_estimate(tile_b), cap))

    cost = pl.CostEstimate(
        flops=2 * grid_b * tile_b * (F * H1p + H1p * H2p + H2p * Tp),
        transcendentals=0,
        bytes_accessed=(B * F * 4 + B * Tp * 4
                        + (F * H1p + H1p * H2p + H2p * Tp) * 2
                        + (H1p + H2p + Tp) * 4),
    )

    def make_call(single_buffer_weights):
        if single_buffer_weights:
            def resident(shape):   # constant index_map + 1 buffer -> stays in VMEM
                return pl.BlockSpec(shape, lambda i: (0, 0),
                                    pipeline_mode=pl.Buffered(1))
        else:
            def resident(shape):
                return pl.BlockSpec(shape, lambda i: (0, 0))

        in_specs = [
            pl.BlockSpec((tile_b, F), lambda i: (i, 0)),   # streamed x tiles (f32)
            resident((F, H1p)), resident((1, H1p)),
            resident((H1p, H2p)), resident((1, H2p)),
            resident((H2p, Tp)), resident((1, Tp)),
        ]
        out_spec = pl.BlockSpec((tile_b, Tp), lambda i: (i, 0))

        return pl.pallas_call(
            mlp_kernel,
            out_shape=jax.ShapeDtypeStruct((B, Tp), jnp.float32),
            grid=(grid_b,),
            in_specs=in_specs,
            out_specs=out_spec,
            compiler_params=pltpu.CompilerParams(
                dimension_semantics=("parallel",),
                vmem_limit_bytes=vmem_bytes,
            ),
            cost_estimate=cost,
        )

    xin = x if x.dtype == jnp.float32 else x.astype(jnp.float32)
    args = (xin, w1p, b1p, w2p, b2p, w3p, b3p)
    try:
        out = jax.block_until_ready(make_call(True)(*args))
    except Exception:
        # Fallback if this JAX build rejects single-buffered (Buffered(1)) specs.
        out = jax.block_until_ready(make_call(False)(*args))

    return out[:, :T]


# ---------------------------------------------------------------------------
# Parameter construction (mirrors nn.Module shapes) + BN / weight-norm folding.
# ---------------------------------------------------------------------------
def _fold_bn(gamma, beta, mean, var):
    scale = gamma / jnp.sqrt(var + BN_EPS)
    shift = beta - mean * scale
    return scale, shift


def _weight_norm_effective(v, g):
    # nn.utils.weight_norm on Linear, default dim=0:
    #   W[i, :] = g[i] * v[i, :] / ||v[i, :]||_2,  v of shape (out, in)
    # (recalibrate_layer is a NaN guard; params here are finite -> no-op.)
    norm = jnp.sqrt(jnp.sum(v * v, axis=1, keepdims=True))
    return (g[:, None] * v / norm).T   # [in, out] so the kernel does x @ W


def _fold_bn_into_linear(scale, shift, w, b):
    # (x * scale + shift) @ W + b  ==  x @ (diag(scale) W) + (shift @ W + b)
    w_f = scale[:, None] * w
    b_f = shift @ w + b
    return w_f, b_f


def make_params(key, num_features, num_targets, hidden_size_1, hidden_size_2):
    keys = jax.random.split(key, 21)   # 3 BN * 4 keys + 3 Linear * 3 keys
    k = iter(keys)

    def bn(c):
        gamma = 1.0 + 0.1 * jax.random.normal(next(k), (c,), jnp.float32)
        beta = 0.1 * jax.random.normal(next(k), (c,), jnp.float32)
        mean = 0.05 * jax.random.normal(next(k), (c,), jnp.float32)
        var = jnp.abs(1.0 + 0.1 * jax.random.normal(next(k), (c,), jnp.float32))
        return _fold_bn(gamma, beta, mean, var)

    def linear(fan_in, fan_out):
        v = 0.1 * jax.random.normal(next(k), (fan_out, fan_in), jnp.float32)
        g = 1.0 + 0.05 * jax.random.normal(next(k), (fan_out,), jnp.float32)
        b = 0.02 * jax.random.normal(next(k), (fan_out,), jnp.float32)
        return _weight_norm_effective(v, g), b

    s1, t1 = bn(num_features)
    w1, b1 = linear(num_features, hidden_size_1)
    s2, t2 = bn(hidden_size_1)
    w2, b2 = linear(hidden_size_1, hidden_size_2)
    s3, t3 = bn(hidden_size_2)
    w3, b3 = linear(hidden_size_2, num_targets)

    w1f, b1f = _fold_bn_into_linear(s1, t1, w1, b1)
    w2f, b2f = _fold_bn_into_linear(s2, t2, w2, b2)
    w3f, b3f = _fold_bn_into_linear(s3, t3, w3, b3)

    # Dropout layers are identity at inference; nothing to store for them.
    return dict(w1=w1f, b1=b1f, w2=w2f, b2=b2f, w3=w3f, b3=b3f)


def prepare_params(folded):
    """One-time lane-padding (output dims only) + bf16 cast of folded weights.

    Zero padding is exact: padded hidden columns get zero weight + zero bias,
    LeakyReLU(0) == 0, and they hit zero weight rows in the next layer.  The
    contraction dim of the first matmul (F) is intentionally left unpadded.
    """
    w1, w2, w3 = folded["w1"], folded["w2"], folded["w3"]
    b1, b2, b3 = folded["b1"], folded["b2"], folded["b3"]
    F, H1 = w1.shape
    H2, T = w2.shape[1], w3.shape[1]
    H1p, H2p, Tp = (_round_up(d, LANE) for d in (H1, H2, T))

    def padw(w, rows, cols):
        return jnp.pad(w, ((0, rows - w.shape[0]),
                           (0, cols - w.shape[1]))).astype(jnp.bfloat16)

    def padb(b, cols):
        b2d = b.reshape(1, -1)
        return jnp.pad(b2d, ((0, 0), (0, cols - b2d.shape[1]))).astype(jnp.float32)

    return dict(
        w1=padw(w1, F, H1p), b1=padb(b1, H1p),
        w2=padw(w2, H1p, H2p), b2=padb(b2, H2p),
        w3=padw(w3, H2p, Tp), b3=padb(b3, Tp),
        num_features=F, num_targets=T,
    )


def reference_forward(x, folded):
    """Pure-JAX reference with identical bf16-operand / f32-accumulate math."""
    bf = jnp.bfloat16
    w1, w2, w3 = (folded[n].astype(bf) for n in ("w1", "w2", "w3"))
    b1, b2, b3 = folded["b1"], folded["b2"], folded["b3"]

    h = jnp.dot(x.astype(bf), w1, preferred_element_type=jnp.float32)
    h = _leaky_relu(h + b1).astype(bf)
    h = jnp.dot(h, w2, preferred_element_type=jnp.float32)
    h = _leaky_relu(h + b2).astype(bf)
    h = jnp.dot(h, w3, preferred_element_type=jnp.float32)
    return h + b3


if __name__ == "__main__":
    # Small shapes consistent with the module (orig: F~875, H1=H2=1024, T=206).
    B, F, H1, H2, T = 16, 48, 64, 64, 24

    key = jax.random.PRNGKey(0)
    kx, kp = jax.random.split(key)
    x = jax.random.normal(kx, (B, F), jnp.float32)

    folded = make_params(kp, F, T, H1, H2)
    prep = prepare_params(folded)          # one-time pad + bf16 cast

    out = model_simple_forward(x, prep)
    out = jax.block_until_ready(out)

    ref = reference_forward(x, folded)
    assert out.shape == (B, T), out.shape
    assert jnp.allclose(out, ref, atol=2e-2, rtol=2e-2), (
        float(jnp.max(jnp.abs(out - ref))))

    print("KERNEL_OK")
</pallas_src>

<mosaic_0001>
module attributes {stable_mosaic.version = 11 : i64} {
  func.func @mlp_kernel(%arg0: i32, %arg1: memref<8x48xf32, #tpu.memory_space<vmem>>, %arg2: memref<48x128xbf16, #tpu.memory_space<vmem>>, %arg3: memref<1x128xf32, #tpu.memory_space<vmem>>, %arg4: memref<128x128xbf16, #tpu.memory_space<vmem>>, %arg5: memref<1x128xf32, #tpu.memory_space<vmem>>, %arg6: memref<128x128xbf16, #tpu.memory_space<vmem>>, %arg7: memref<1x128xf32, #tpu.memory_space<vmem>>, %arg8: memref<8x128xf32, #tpu.memory_space<vmem>>) attributes {dimension_semantics = [#tpu.dimension_semantics<parallel>], iteration_bounds = array<i64: 2>, scalar_prefetch = 0 : i64, scratch_operands = 0 : i64, tpu.core_type = #tpu.core_type<tc>, window_params = [{transform_indices = @transform_0, window_bounds = array<i64: 8, 48>}, {pipeline_mode = #tpu.pipeline_mode<synchronous>, transform_indices = @transform_1, window_bounds = array<i64: 48, 128>}, {pipeline_mode = #tpu.pipeline_mode<synchronous>, transform_indices = @transform_2, window_bounds = array<i64: 1, 128>}, {pipeline_mode = #tpu.pipeline_mode<synchronous>, transform_indices = @transform_3, window_bounds = array<i64: 128, 128>}, {pipeline_mode = #tpu.pipeline_mode<synchronous>, transform_indices = @transform_4, window_bounds = array<i64: 1, 128>}, {pipeline_mode = #tpu.pipeline_mode<synchronous>, transform_indices = @transform_5, window_bounds = array<i64: 128, 128>}, {pipeline_mode = #tpu.pipeline_mode<synchronous>, transform_indices = @transform_6, window_bounds = array<i64: 1, 128>}, {transform_indices = @transform_7, window_bounds = array<i64: 8, 128>}]} {
    %c0 = arith.constant 0 : index
    %c0_0 = arith.constant 0 : index
    %0 = vector.load %arg1[%c0, %c0_0] : memref<8x48xf32, #tpu.memory_space<vmem>>, vector<8x48xf32>
    %1 = arith.truncf %0 : vector<8x48xf32> to vector<8x48xbf16>
    %c0_1 = arith.constant 0 : index
    %c0_2 = arith.constant 0 : index
    %2 = vector.load %arg2[%c0_1, %c0_2] : memref<48x128xbf16, #tpu.memory_space<vmem>>, vector<48x128xbf16>
    %cst = arith.constant dense<0.000000e+00> : vector<8x128xf32>
    %3 = tpu.matmul %1, %2, %cst {dimension_numbers = #tpu.dot_dimension_numbers<[1], [0], [0], [1], [0, 0, 1, 1], [], []>} : vector<8x48xbf16>, vector<48x128xbf16>, vector<8x128xf32> -> vector<8x128xf32>
    %c0_3 = arith.constant 0 : index
    %c0_4 = arith.constant 0 : index
    %4 = vector.load %arg3[%c0_3, %c0_4] : memref<1x128xf32, #tpu.memory_space<vmem>>, vector<1x128xf32>
    %5 = vector.broadcast %4 : vector<1x128xf32> to vector<8x128xf32>
    %6 = arith.addf %3, %5 : vector<8x128xf32>
    %cst_5 = arith.constant 0.000000e+00 : f32
    %7 = vector.broadcast %cst_5 : f32 to vector<8x128xf32>
    %8 = arith.cmpf ogt, %6, %7 : vector<8x128xf32>
    %cst_6 = arith.constant 0.00999999977 : f32
    %9 = vector.broadcast %cst_6 : f32 to vector<8x128xf32>
    %10 = arith.mulf %9, %6 : vector<8x128xf32>
    %11 = arith.select %8, %6, %10 : vector<8x128xi1>, vector<8x128xf32>
    %12 = arith.truncf %11 : vector<8x128xf32> to vector<8x128xbf16>
    %c0_7 = arith.constant 0 : index
    %c0_8 = arith.constant 0 : index
    %13 = vector.load %arg4[%c0_7, %c0_8] : memref<128x128xbf16, #tpu.memory_space<vmem>>, vector<128x128xbf16>
    %cst_9 = arith.constant dense<0.000000e+00> : vector<8x128xf32>
    %14 = tpu.matmul %12, %13, %cst_9 {dimension_numbers = #tpu.dot_dimension_numbers<[1], [0], [0], [1], [0, 0, 1, 1], [], []>} : vector<8x128xbf16>, vector<128x128xbf16>, vector<8x128xf32> -> vector<8x128xf32>
    %c0_10 = arith.constant 0 : index
    %c0_11 = arith.constant 0 : index
    %15 = vector.load %arg5[%c0_10, %c0_11] : memref<1x128xf32, #tpu.memory_space<vmem>>, vector<1x128xf32>
    %16 = vector.broadcast %15 : vector<1x128xf32> to vector<8x128xf32>
    %17 = arith.addf %14, %16 : vector<8x128xf32>
    %cst_12 = arith.constant 0.000000e+00 : f32
    %18 = vector.broadcast %cst_12 : f32 to vector<8x128xf32>
    %19 = arith.cmpf ogt, %17, %18 : vector<8x128xf32>
    %cst_13 = arith.constant 0.00999999977 : f32
    %20 = vector.broadcast %cst_13 : f32 to vector<8x128xf32>
    %21 = arith.mulf %20, %17 : vector<8x128xf32>
    %22 = arith.select %19, %17, %21 : vector<8x128xi1>, vector<8x128xf32>
    %23 = arith.truncf %22 : vector<8x128xf32> to vector<8x128xbf16>
    %c0_14 = arith.constant 0 : index
    %c0_15 = arith.constant 0 : index
    %24 = vector.load %arg6[%c0_14, %c0_15] : memref<128x128xbf16, #tpu.memory_space<vmem>>, vector<128x128xbf16>
    %cst_16 = arith.constant dense<0.000000e+00> : vector<8x128xf32>
    %25 = tpu.matmul %23, %24, %cst_16 {dimension_numbers = #tpu.dot_dimension_numbers<[1], [0], [0], [1], [0, 0, 1, 1], [], []>} : vector<8x128xbf16>, vector<128x128xbf16>, vector<8x128xf32> -> vector<8x128xf32>
    %c0_17 = arith.constant 0 : index
    %c0_18 = arith.constant 0 : index
    %26 = vector.load %arg7[%c0_17, %c0_18] : memref<1x128xf32, #tpu.memory_space<vmem>>, vector<1x128xf32>
    %27 = vector.broadcast %26 : vector<1x128xf32> to vector<8x128xf32>
    %28 = arith.addf %25, %27 : vector<8x128xf32>
    %c0_19 = arith.constant 0 : index
    %c0_20 = arith.constant 0 : index
    %29 = vector.load %arg8[%c0_19, %c0_20] : memref<8x128xf32, #tpu.memory_space<vmem>>, vector<8x128xf32>
    tpu.vector_store %arg8[%c0_19, %c0_20], %28 {strides = array<i32>} : memref<8x128xf32, #tpu.memory_space<vmem>>, vector<8x128xf32>,
    return
  }
  func.func @transform_0(%arg0: i32) -> (i32, i32) {
    %c0_i32 = arith.constant 0 : i32
    %c0_i32_0 = arith.constant 0 : i32
    return %arg0, %c0_i32 : i32, i32
  }
  func.func @transform_1(%arg0: i32) -> (i32, i32) {
    %c0_i32 = arith.constant 0 : i32
    %c0_i32_0 = arith.constant 0 : i32
    %c0_i32_1 = arith.constant 0 : i32
    return %c0_i32, %c0_i32_0 : i32, i32
  }
  func.func @transform_2(%arg0: i32) -> (i32, i32) {
    %c0_i32 = arith.constant 0 : i32
    %c0_i32_0 = arith.constant 0 : i32
    %c0_i32_1 = arith.constant 0 : i32
    return %c0_i32, %c0_i32_0 : i32, i32
  }
  func.func @transform_3(%arg0: i32) -> (i32, i32) {
    %c0_i32 = arith.constant 0 : i32
    %c0_i32_0 = arith.constant 0 : i32
    %c0_i32_1 = arith.constant 0 : i32
    return %c0_i32, %c0_i32_0 : i32, i32
  }
  func.func @transform_4(%arg0: i32) -> (i32, i32) {
    %c0_i32 = arith.constant 0 : i32
    %c0_i32_0 = arith.constant 0 : i32
    %c0_i32_1 = arith.constant 0 : i32
    return %c0_i32, %c0_i32_0 : i32, i32
  }
  func.func @transform_5(%arg0: i32) -> (i32, i32) {
    %c0_i32 = arith.constant 0 : i32
    %c0_i32_0 = arith.constant 0 : i32
    %c0_i32_1 = arith.constant 0 : i32
    return %c0_i32, %c0_i32_0 : i32, i32
  }
  func.func @transform_6(%arg0: i32) -> (i32, i32) {
    %c0_i32 = arith.constant 0 : i32
    %c0_i32_0 = arith.constant 0 : i32
    %c0_i32_1 = arith.constant 0 : i32
    return %c0_i32, %c0_i32_0 : i32, i32
  }
  func.func @transform_7(%arg0: i32) -> (i32, i32) {
    %c0_i32 = arith.constant 0 : i32
    %c0_i32_0 = arith.constant 0 : i32
    return %arg0, %c0_i32 : i32, i32
  }
}

module attributes {stable_mosaic.version = 11 : i64} {
  func.func @mlp_kernel(%arg0: i32, %arg1: memref<8x48xf32, #tpu.memory_space<vmem>>, %arg2: memref<48x128xbf16, #tpu.memory_space<vmem>>, %arg3: memref<1x128xf32, #tpu.memory_space<vmem>>, %arg4: memref<128x128xbf16, #tpu.memory_space<vmem>>, %arg5: memref<1x128xf32, #tpu.memory_space<vmem>>, %arg6: memref<128x128xbf16, #tpu.memory_space<vmem>>, %arg7: memref<1x128xf32, #tpu.memory_space<vmem>>, %arg8: memref<8x128xf32, #tpu.memory_space<vmem>>) attributes {dimension_semantics = [#tpu.dimension_semantics<parallel>], iteration_bounds = array<i64: 2>, scalar_prefetch = 0 : i64, scratch_operands = 0 : i64, tpu.core_type = #tpu.core_type<tc>, window_params = [{transform_indices = @transform_0, window_bounds = array<i64: 8, 48>}, {pipeline_mode = #tpu.pipeline_mode<synchronous>, transform_indices = @transform_1, window_bounds = array<i64: 48, 128>}, {pipeline_mode = #tpu.pipeline_mode<synchronous>, transform_indices = @transform_2, window_bounds = array<i64: 1, 128>}, {pipeline_mode = #tpu.pipeline_mode<synchronous>, transform_indices = @transform_3, window_bounds = array<i64: 128, 128>}, {pipeline_mode = #tpu.pipeline_mode<synchronous>, transform_indices = @transform_4, window_bounds = array<i64: 1, 128>}, {pipeline_mode = #tpu.pipeline_mode<synchronous>, transform_indices = @transform_5, window_bounds = array<i64: 128, 128>}, {pipeline_mode = #tpu.pipeline_mode<synchronous>, transform_indices = @transform_6, window_bounds = array<i64: 1, 128>}, {transform_indices = @transform_7, window_bounds = array<i64: 8, 128>}]} {
    %c0 = arith.constant 0 : index
    %c0_0 = arith.constant 0 : index
    %0 = vector.load %arg1[%c0, %c0_0] : memref<8x48xf32, #tpu.memory_space<vmem>>, vector<8x48xf32>
    %1 = arith.truncf %0 : vector<8x48xf32> to vector<8x48xbf16>
    %c0_1 = arith.constant 0 : index
    %c0_2 = arith.constant 0 : index
    %2 = vector.load %arg2[%c0_1, %c0_2] : memref<48x128xbf16, #tpu.memory_space<vmem>>, vector<48x128xbf16>
    %cst = arith.constant dense<0.000000e+00> : vector<8x128xf32>
    %3 = tpu.matmul %1, %2, %cst {dimension_numbers = #tpu.dot_dimension_numbers<[1], [0], [0], [1], [0, 0, 1, 1], [], []>} : vector<8x48xbf16>, vector<48x128xbf16>, vector<8x128xf32> -> vector<8x128xf32>
    %c0_3 = arith.constant 0 : index
    %c0_4 = arith.constant 0 : index
    %4 = vector.load %arg3[%c0_3, %c0_4] : memref<1x128xf32, #tpu.memory_space<vmem>>, vector<1x128xf32>
    %5 = vector.broadcast %4 : vector<1x128xf32> to vector<8x128xf32>
    %6 = arith.addf %3, %5 : vector<8x128xf32>
    %cst_5 = arith.constant 0.000000e+00 : f32
    %7 = vector.broadcast %cst_5 : f32 to vector<8x128xf32>
    %8 = arith.cmpf ogt, %6, %7 : vector<8x128xf32>
    %cst_6 = arith.constant 0.00999999977 : f32
    %9 = vector.broadcast %cst_6 : f32 to vector<8x128xf32>
    %10 = arith.mulf %9, %6 : vector<8x128xf32>
    %11 = arith.select %8, %6, %10 : vector<8x128xi1>, vector<8x128xf32>
    %12 = arith.truncf %11 : vector<8x128xf32> to vector<8x128xbf16>
    %c0_7 = arith.constant 0 : index
    %c0_8 = arith.constant 0 : index
    %13 = vector.load %arg4[%c0_7, %c0_8] : memref<128x128xbf16, #tpu.memory_space<vmem>>, vector<128x128xbf16>
    %cst_9 = arith.constant dense<0.000000e+00> : vector<8x128xf32>
    %14 = tpu.matmul %12, %13, %cst_9 {dimension_numbers = #tpu.dot_dimension_numbers<[1], [0], [0], [1], [0, 0, 1, 1], [], []>} : vector<8x128xbf16>, vector<128x128xbf16>, vector<8x128xf32> -> vector<8x128xf32>
    %c0_10 = arith.constant 0 : index
    %c0_11 = arith.constant 0 : index
    %15 = vector.load %arg5[%c0_10, %c0_11] : memref<1x128xf32, #tpu.memory_space<vmem>>, vector<1x128xf32>
    %16 = vector.broadcast %15 : vector<1x128xf32> to vector<8x128xf32>
    %17 = arith.addf %14, %16 : vector<8x128xf32>
    %cst_12 = arith.constant 0.000000e+00 : f32
    %18 = vector.broadcast %cst_12 : f32 to vector<8x128xf32>
    %19 = arith.cmpf ogt, %17, %18 : vector<8x128xf32>
    %cst_13 = arith.constant 0.00999999977 : f32
    %20 = vector.broadcast %cst_13 : f32 to vector<8x128xf32>
    %21 = arith.mulf %20, %17 : vector<8x128xf32>
    %22 = arith.select %19, %17, %21 : vector<8x128xi1>, vector<8x128xf32>
    %23 = arith.truncf %22 : vector<8x128xf32> to vector<8x128xbf16>
    %c0_14 = arith.constant 0 : index
    %c0_15 = arith.constant 0 : index
    %24 = vector.load %arg6[%c0_14, %c0_15] : memref<128x128xbf16, #tpu.memory_space<vmem>>, vector<128x128xbf16>
    %cst_16 = arith.constant dense<0.000000e+00> : vector<8x128xf32>
    %25 = tpu.matmul %23, %24, %cst_16 {dimension_numbers = #tpu.dot_dimension_numbers<[1], [0], [0], [1], [0, 0, 1, 1], [], []>} : vector<8x128xbf16>, vector<128x128xbf16>, vector<8x128xf32> -> vector<8x128xf32>
    %c0_17 = arith.constant 0 : index
    %c0_18 = arith.constant 0 : index
    %26 = vector.load %arg7[%c0_17, %c0_18] : memref<1x128xf32, #tpu.memory_space<vmem>>, vector<1x128xf32>
    %27 = vector.broadcast %26 : vector<1x128xf32> to vector<8x128xf32>
    %28 = arith.addf %25, %27 : vector<8x128xf32>
    %c0_19 = arith.constant 0 : index
    %c0_20 = arith.constant 0 : index
    %29 = vector.load %arg8[%c0_19, %c0_20] : memref<8x128xf32, #tpu.memory_space<vmem>>, vector<8x128xf32>
    tpu.vector_store %arg8[%c0_19, %c0_20], %28 {strides = array<i32>} : memref<8x128xf32, #tpu.memory_space<vmem>>, vector<8x128xf32>,
    return
  }
  func.func @transform_0(%arg0: i32) -> (i32, i32) {
    %c0_i32 = arith.constant 0 : i32
    %c0_i32_0 = arith.constant 0 : i32
    return %arg0, %c0_i32 : i32, i32
  }
  func.func @transform_1(%arg0: i32) -> (i32, i32) {
    %c0_i32 = arith.constant 0 : i32
    %c0_i32_0 = arith.constant 0 : i32
    %c0_i32_1 = arith.constant 0 : i32
    return %c0_i32, %c0_i32_0 : i32, i32
  }
  func.func @transform_2(%arg0: i32) -> (i32, i32) {
    %c0_i32 = arith.constant 0 : i32
    %c0_i32_0 = arith.constant 0 : i32
    %c0_i32_1 = arith.constant 0 : i32
    return %c0_i32, %c0_i32_0 : i32, i32
  }
  func.func @transform_3(%arg0: i32) -> (i32, i32) {
    %c0_i32 = arith.constant 0 : i32
    %c0_i32_0 = arith.constant 0 : i32
    %c0_i32_1 = arith.constant 0 : i32
    return %c0_i32, %c0_i32_0 : i32, i32
  }
  func.func @transform_4(%arg0: i32) -> (i32, i32) {
    %c0_i32 = arith.constant 0 : i32
    %c0_i32_0 = arith.constant 0 : i32
    %c0_i32_1 = arith.constant 0 : i32
    return %c0_i32, %c0_i32_0 : i32, i32
  }
  func.func @transform_5(%arg0: i32) -> (i32, i32) {
    %c0_i32 = arith.constant 0 : i32
    %c0_i32_0 = arith.constant 0 : i32
    %c0_i32_1 = arith.constant 0 : i32
    return %c0_i32, %c0_i32_0 : i32, i32
  }
  func.func @transform_6(%arg0: i32) -> (i32, i32) {
    %c0_i32 = arith.constant 0 : i32
    %c0_i32_0 = arith.constant 0 : i32
    %c0_i32_1 = arith.constant 0 : i32
    return %c0_i32, %c0_i32_0 : i32, i32
  }
  func.func @transform_7(%arg0: i32) -> (i32, i32) {
    %c0_i32 = arith.constant 0 : i32
    %c0_i32_0 = arith.constant 0 : i32
    return %arg0, %c0_i32 : i32, i32
  }
}

</mosaic_0001>

<llo_original>
// kernel: tpu_custom_call.1
$region0: #{tpu_custom_call.1}
  #allocation0 [shape = 'u32[]', space=smem, size = 0x4, offset = 0x4, fixed_abs, tag = 'smem constant byte address 0x4 - core index']
  #allocation1 [shape = 'u32[144,128]{1,0:T(1,128)}', space=vmem, size = 0x12000, scoped, tag = 'internal scratch']
  %s0 = inlined_call_operand.hbm [shape: f32[16,48], index: 0, kind: input, shape index: {}]
  %s1 = inlined_call_operand.hbm [shape: bf16[48,128], index: 1, kind: input, shape index: {}]
  %s2 = inlined_call_operand.vmem [shape: f32[1,128], index: 2, kind: input, shape index: {}]
  %s3 = inlined_call_operand.hbm [shape: bf16[128,128], index: 3, kind: input, shape index: {}]
  %s4 = inlined_call_operand.vmem [shape: f32[1,128], index: 4, kind: input, shape index: {}]
  %s5 = inlined_call_operand.hbm [shape: bf16[128,128], index: 5, kind: input, shape index: {}]
  %s6 = inlined_call_operand.vmem [shape: f32[1,128], index: 6, kind: input, shape index: {}]
  %s7 = inlined_call_operand.hbm [shape: f32[16,128], index: 7, kind: output, shape index: {}]
  %s8 = sld [smem:[#allocation0]]
  $region77: #{tpu_custom_call.1} parent=0
    _
  %s10 = ssub.s32 1, %s8
  %s11 = scalar_select 0, %s10, %s8
  $region1: #{tpu_custom_call.1} parent=0
    #allocation2 [shape = 'u8[8192]{0}', space=vmem, size = 0x2000, scoped, tag = 'input window, operand 0']
    #allocation3 [shape = 's32[2]{0}', space=sflag, size = 0x8, scoped, tag = 'scoped memory for tpu_custom_call.1']
    #allocation4 [shape = 's32[2]{0}', space=sflag, size = 0x8, scoped, tag = 'scoped memory for tpu_custom_call.1']
    #allocation5 [shape = 'u8[12288]{0}', space=vmem, size = 0x3000, scoped, tag = 'input window, operand 1, single buffered']
    #allocation6 [shape = 's32[1]{0}', space=sflag, size = 0x4, scoped, tag = 'scoped memory for tpu_custom_call.1']
    #allocation7 [shape = 'u8[32768]{0}', space=vmem, size = 0x8000, scoped, tag = 'input window, operand 3, single buffered']
    #allocation8 [shape = 'u8[32768]{0}', space=vmem, size = 0x8000, scoped, tag = 'input window, operand 5, single buffered']
    #allocation9 [shape = 's32[1]{0}', space=sflag, size = 0x4, scoped, tag = 'scoped memory for tpu_custom_call.1']
    #allocation10 [shape = 'u8[8192]{0}', space=vmem, size = 0x2000, scoped, tag = 'output window, operand 0']
    %12 = vsyncpa [#allocation3], 0
    %s13 = scalar_lea.sflag [#allocation3], 1
    %14 = vsyncpa %s13, 0
    %15 = vsyncpa [#allocation6], 0
    %16 = vsyncpa [#allocation9], 0
    %17 = vsyncpa [#allocation4], 0
    %s18 = scalar_lea.sflag [#allocation4], 1
    %19 = vsyncpa %s18, 0
    loop: start=0, step=1, limit=4
    $region2: #{tpu_custom_call.1} parent=1 // loop_pre_header
      _
    $region3: #{tpu_custom_call.1} parent=1 // loop_header
      %s21 = sphi 0, %s25
      %p22 = scmp.ge.s32.totalorder %s21, 4
      %s31 = sphi 0, %s33
      %s34 = sphi 0, %s31
      %s35 = sphi 0, %s34
      %s51 = sphi 0, %s35
      %s55 = sphi 0, %s55
      %s57 = sphi 0, %s55
      %s58 = sphi 0, %s57
      %s72 = sphi 0, %s58
      %s76 = sphi 0, %s76
      %s78 = sphi 0, %s76
      %s79 = sphi 0, %s78
      %s93 = sphi 0, %s79
      %s97 = sphi 0, %s97
      %s99 = sphi 0, %s97
      %s100 = sphi 0, %s99
      %s114 = sphi 0, %s100
      %s118 = sphi 0, %s118
      %s120 = sphi 0, %s118
      %s121 = sphi 0, %s120
      %s135 = sphi 0, %s121
      %s139 = sphi 0, %s139
      %s141 = sphi 0, %s139
      %s142 = sphi 0, %s141
      %s156 = sphi 0, %s142
      %s160 = sphi 0, %s160
      %s162 = sphi 0, %s160
      %s163 = sphi 0, %s162
      %s177 = sphi 0, %s163
      %s183 = sphi 0, %s185
      %s186 = sphi 0, %s183
      %s187 = sphi 0, %s186
      %s203 = sphi 0, %s187
    $region4: #{tpu_custom_call.1} parent=1 // loop_header_branch
      %24 = sbr.rel (%p22) target = $region8
    $region5: #{tpu_custom_call.1} parent=1 // loop_body
      %s26 = ssub.s32 %s21, 1
      %s27 = ssub.s32 %s21, 2
      %s28 = sadd.s32 %s21, 1
      %s29 = ssub.s32 %s21, %s28
      %p30 = scmp.eq.s32.totalorder %s29, 0
      %s32 = sadd.s32 %s31, 1
      %s33 = scalar_select %p30, %s31, %s32
      %p36 = pneg %p30
      %p37 = scmp.eq.s32.totalorder %s21, 1
      %p38 = por %p36, %p37
      %p39 = scmp.ne.s32.totalorder %s31, %s34
      %p40 = scmp.eq.s32.totalorder %s21, 0
      %p41 = por %p39, %p40
      %p42 = scmp.ne.s32.totalorder %s31, %s34
      %p43 = scmp.eq.s32.totalorder %s26, 1
      %p44 = por %p42, %p43
      %p45 = scmp.ne.s32.totalorder %s34, %s35
      %p46 = scmp.eq.s32.totalorder %s26, 0
      %p47 = por %p45, %p46
      %p48 = scmp.ne.s32.totalorder %s34, %s35
      %p49 = scmp.eq.s32.totalorder %s27, 1
      %p50 = por %p48, %p49
      %p52 = scmp.ne.s32.totalorder %s35, %s51
      %p53 = scmp.eq.s32.totalorder %s27, 0
      %p54 = por %p52, %p53
      %s56 = sadd.s32 %s55, 1
      %p59 = scmp.eq.s32.totalorder %s21, 1
      %p60 = scmp.ne.s32.totalorder %s55, %s57
      %p61 = scmp.eq.s32.totalorder %s21, 0
      %p62 = por %p60, %p61
      %p63 = scmp.ne.s32.totalorder %s55, %s57
      %p64 = scmp.eq.s32.totalorder %s26, 1
      %p65 = por %p63, %p64
      %p66 = scmp.ne.s32.totalorder %s57, %s58
      %p67 = scmp.eq.s32.totalorder %s26, 0
      %p68 = por %p66, %p67
      %p69 = scmp.ne.s32.totalorder %s57, %s58
      %p70 = scmp.eq.s32.totalorder %s27, 1
      %p71 = por %p69, %p70
      %p73 = scmp.ne.s32.totalorder %s58, %s72
      %p74 = scmp.eq.s32.totalorder %s27, 0
      %p75 = por %p73, %p74
      %s77 = sadd.s32 %s76, 1
      %p80 = scmp.eq.s32.totalorder %s21, 1
      %p81 = scmp.ne.s32.totalorder %s76, %s78
      %p82 = scmp.eq.s32.totalorder %s21, 0
      %p83 = por %p81, %p82
      %p84 = scmp.ne.s32.totalorder %s76, %s78
      %p85 = scmp.eq.s32.totalorder %s26, 1
      %p86 = por %p84, %p85
      %p87 = scmp.ne.s32.totalorder %s78, %s79
      %p88 = scmp.eq.s32.totalorder %s26, 0
      %p89 = por %p87, %p88
      %p90 = scmp.ne.s32.totalorder %s78, %s79
      %p91 = scmp.eq.s32.totalorder %s27, 1
      %p92 = por %p90, %p91
      %p94 = scmp.ne.s32.totalorder %s79, %s93
      %p95 = scmp.eq.s32.totalorder %s27, 0
      %p96 = por %p94, %p95
      %s98 = sadd.s32 %s97, 1
      %p101 = scmp.eq.s32.totalorder %s21, 1
      %p102 = scmp.ne.s32.totalorder %s97, %s99
      %p103 = scmp.eq.s32.totalorder %s21, 0
      %p104 = por %p102, %p103
      %p105 = scmp.ne.s32.totalorder %s97, %s99
      %p106 = scmp.eq.s32.totalorder %s26, 1
      %p107 = por %p105, %p106
      %p108 = scmp.ne.s32.totalorder %s99, %s100
      %p109 = scmp.eq.s32.totalorder %s26, 0
      %p110 = por %p108, %p109
      %p111 = scmp.ne.s32.totalorder %s99, %s100
      %p112 = scmp.eq.s32.totalorder %s27, 1
      %p113 = por %p111, %p112
      %p115 = scmp.ne.s32.totalorder %s100, %s114
      %p116 = scmp.eq.s32.totalorder %s27, 0
      %p117 = por %p115, %p116
      %s119 = sadd.s32 %s118, 1
      %p122 = scmp.eq.s32.totalorder %s21, 1
      %p123 = scmp.ne.s32.totalorder %s118, %s120
      %p124 = scmp.eq.s32.totalorder %s21, 0
      %p125 = por %p123, %p124
      %p126 = scmp.ne.s32.totalorder %s118, %s120
      %p127 = scmp.eq.s32.totalorder %s26, 1
      %p128 = por %p126, %p127
      %p129 = scmp.ne.s32.totalorder %s120, %s121
      %p130 = scmp.eq.s32.totalorder %s26, 0
      %p131 = por %p129, %p130
      %p132 = scmp.ne.s32.totalorder %s120, %s121
      %p133 = scmp.eq.s32.totalorder %s27, 1
      %p134 = por %p132, %p133
      %p136 = scmp.ne.s32.totalorder %s121, %s135
      %p137 = scmp.eq.s32.totalorder %s27, 0
      %p138 = por %p136, %p137
      %s140 = sadd.s32 %s139, 1
      %p143 = scmp.eq.s32.totalorder %s21, 1
      %p144 = scmp.ne.s32.totalorder %s139, %s141
      %p145 = scmp.eq.s32.totalorder %s21, 0
      %p146 = por %p144, %p145
      %p147 = scmp.ne.s32.totalorder %s139, %s141
      %p148 = scmp.eq.s32.totalorder %s26, 1
      %p149 = por %p147, %p148
      %p150 = scmp.ne.s32.totalorder %s141, %s142
      %p151 = scmp.eq.s32.totalorder %s26, 0
      %p152 = por %p150, %p151
      %p153 = scmp.ne.s32.totalorder %s141, %s142
      %p154 = scmp.eq.s32.totalorder %s27, 1
      %p155 = por %p153, %p154
      %p157 = scmp.ne.s32.totalorder %s142, %s156
      %p158 = scmp.eq.s32.totalorder %s27, 0
      %p159 = por %p157, %p158
      %s161 = sadd.s32 %s160, 1
      %p164 = scmp.eq.s32.totalorder %s21, 1
      %p165 = scmp.ne.s32.totalorder %s160, %s162
      %p166 = scmp.eq.s32.totalorder %s21, 0
      %p167 = por %p165, %p166
      %p168 = scmp.ne.s32.totalorder %s160, %s162
      %p169 = scmp.eq.s32.totalorder %s26, 1
      %p170 = por %p168, %p169
      %p171 = scmp.ne.s32.totalorder %s162, %s163
      %p172 = scmp.eq.s32.totalorder %s26, 0
      %p173 = por %p171, %p172
      %p174 = scmp.ne.s32.totalorder %s162, %s163
      %p175 = scmp.eq.s32.totalorder %s27, 1
      %p176 = por %p174, %p175
      %p178 = scmp.ne.s32.totalorder %s163, %s177
      %p179 = scmp.eq.s32.totalorder %s27, 0
      %p180 = por %p178, %p179
      %s181 = ssub.s32 %s21, %s28
      %p182 = scmp.eq.s32.totalorder %s181, 0
      %s184 = sadd.s32 %s183, 1
      %s185 = scalar_select %p182, %s183, %s184
      %p188 = pneg %p182
      %p189 = scmp.eq.s32.totalorder %s21, 1
      %p190 = por %p188, %p189
      %p191 = scmp.ne.s32.totalorder %s183, %s186
      %p192 = scmp.eq.s32.totalorder %s21, 0
      %p193 = por %p191, %p192
      %p194 = scmp.ne.s32.totalorder %s183, %s186
      %p195 = scmp.eq.s32.totalorder %s26, 1
      %p196 = por %p194, %p195
      %p197 = scmp.ne.s32.totalorder %s186, %s187
      %p198 = scmp.eq.s32.totalorder %s26, 0
      %p199 = por %p197, %p198
      %p200 = scmp.ne.s32.totalorder %s186, %s187
      %p201 = scmp.eq.s32.totalorder %s27, 1
      %p202 = por %p200, %p201
      %p204 = scmp.ne.s32.totalorder %s187, %s203
      %p205 = scmp.eq.s32.totalorder %s27, 0
      %p206 = por %p204, %p205
      %p207 = scmp.le.s32.totalorder 1, %s21
      %p208 = scmp.lt.s32.totalorder %s21, 3
      %p209 = pnand %p207, %p208
      %p210 = pneg %p209
      // Predicated region
      $region9: #{tpu_custom_call.1} parent=5 // pred_check
        _
      $region10: #{tpu_custom_call.1} parent=5 // pred_check_branch
        %212 = sbr.rel (%p209) target = $region12
      $region11: #{tpu_custom_call.1} parent=5 // pred_region
        %s213 = ssub.s32 %s21, 1
        // Predicated region
        $region13: #{tpu_custom_call.1} parent=11 // pred_check
          %p214 = pneg %p68
        $region14: #{tpu_custom_call.1} parent=11 // pred_check_branch
          %216 = sbr.rel (%p214) target = $region16
        $region15: #{tpu_custom_call.1} parent=11 // pred_region
          %s218 = ssub.s32 384, 384
          %219 = vsyncadd [#allocation6], %s218
          %s220 = sshll.u32 [#allocation5], 4
          %s221 = int_to_ptr.vmem [resolvable:$true] %s220
          %226 = dma.hbm_to_vmem [thread:$0]  %s1, 384, %s221, [#allocation6], 64, 64, 4
        $region16: #{tpu_custom_call.1} parent=11 // pred_fallthru
          _
        // Predicated region
        $region17: #{tpu_custom_call.1} parent=11 // pred_check
          %p227 = pneg %p89
        $region18: #{tpu_custom_call.1} parent=11 // pred_check_branch
          %229 = sbr.rel (%p227) target = $region20
        $region19: #{tpu_custom_call.1} parent=11 // pred_region
          _
        $region20: #{tpu_custom_call.1} parent=11 // pred_fallthru
          _
        // Predicated region
        $region21: #{tpu_custom_call.1} parent=11 // pred_check
          %p230 = pneg %p110
        $region22: #{tpu_custom_call.1} parent=11 // pred_check_branch
          %232 = sbr.rel (%p230) target = $region24
        $region23: #{tpu_custom_call.1} parent=11 // pred_region
          %s234 = ssub.s32 1024, 1024
          %235 = vsyncadd [#allocation6], %s234
          %s236 = sshll.u32 [#allocation7], 4
          %s237 = int_to_ptr.vmem [resolvable:$true] %s236
          %242 = dma.hbm_to_vmem [thread:$0]  %s3, 1024, %s237, [#allocation6], 64, 64, 4
        $region24: #{tpu_custom_call.1} parent=11 // pred_fallthru
          _
        // Predicated region
        $region25: #{tpu_custom_call.1} parent=11 // pred_check
          %p243 = pneg %p131
        $region26: #{tpu_custom_call.1} parent=11 // pred_check_branch
          %245 = sbr.rel (%p243) target = $region28
        $region27: #{tpu_custom_call.1} parent=11 // pred_region
          _
        $region28: #{tpu_custom_call.1} parent=11 // pred_fallthru
          _
        // Predicated region
        $region29: #{tpu_custom_call.1} parent=11 // pred_check
          %p246 = pneg %p152
        $region30: #{tpu_custom_call.1} parent=11 // pred_check_branch
          %248 = sbr.rel (%p246) target = $region32
        $region31: #{tpu_custom_call.1} parent=11 // pred_region
          %s250 = ssub.s32 1024, 1024
          %251 = vsyncadd [#allocation9], %s250
          %s252 = sshll.u32 [#allocation8], 4
          %s253 = int_to_ptr.vmem [resolvable:$true] %s252
          %258 = dma.hbm_to_vmem [thread:$0]  %s5, 1024, %s253, [#allocation9], 64, 64, 4
        $region32: #{tpu_custom_call.1} parent=11 // pred_fallthru
          _
        // Predicated region
        $region33: #{tpu_custom_call.1} parent=11 // pred_check
          %p259 = pneg %p173
        $region34: #{tpu_custom_call.1} parent=11 // pred_check_branch
          %261 = sbr.rel (%p259) target = $region36
        $region35: #{tpu_custom_call.1} parent=11 // pred_region
          _
        $region36: #{tpu_custom_call.1} parent=11 // pred_fallthru
          _
      $region12: #{tpu_custom_call.1} parent=5 // pred_fallthru
        _
      %p262 = scmp.lt.s32.totalorder %s21, 2
      // Predicated region
      $region37: #{tpu_custom_call.1} parent=5 // pred_check
        %p263 = pneg %p262
      $region38: #{tpu_custom_call.1} parent=5 // pred_check_branch
        %265 = sbr.rel (%p263) target = $region40
      $region39: #{tpu_custom_call.1} parent=5 // pred_region
        // Predicated region
        $region41: #{tpu_custom_call.1} parent=39 // pred_check
          %p266 = pneg %p41
        $region42: #{tpu_custom_call.1} parent=39 // pred_check_branch
          %268 = sbr.rel (%p266) target = $region44
        $region43: #{tpu_custom_call.1} parent=39 // pred_region
          %s269 = sand.u32 %s31, 1
          %s270 = scalar_lea.sflag [#allocation3], %s269
          %s271 = sand.u32 %s31, 1
          %s272 = smul.addr %s271, 8
          %s273 = scalar_lea.vmem [#allocation2], %s272
          %s275 = ssub.s32 128, 128
          %276 = vsyncadd %s270, %s275
          %s277 = smul.addr %s21, 128
          %s278 = scalar_lea.hbm %s0, %s277
          %s280 = sshll.u32 %s273, 4
          %s281 = int_to_ptr.vmem [resolvable:$true] %s280
          %283 = dma.hbm_to_vmem [thread:$0]  %s278, 128, %s281, %s270
        $region44: #{tpu_custom_call.1} parent=39 // pred_fallthru
          _
      $region40: #{tpu_custom_call.1} parent=5 // pred_fallthru
        _
      %p284 = scmp.le.s32.totalorder 1, %s21
      %p285 = scmp.lt.s32.totalorder %s21, 3
      %p286 = pnand %p284, %p285
      %p287 = pneg %p286
      // Predicated region
      $region45: #{tpu_custom_call.1} parent=5 // pred_check
        _
      $region46: #{tpu_custom_call.1} parent=5 // pred_check_branch
        %289 = sbr.rel (%p286) target = $region48
      $region47: #{tpu_custom_call.1} parent=5 // pred_region
        %s290 = ssub.s32 %s21, 1
        %s291 = sand.u32 %s34, 1
        %s292 = scalar_lea.sflag [#allocation3], %s291
        %s293 = sand.u32 %s34, 1
        %s294 = smul.addr %s293, 8
        %s295 = scalar_lea.vmem [#allocation2], %s294
        // Predicated region
        $region49: #{tpu_custom_call.1} parent=47 // pred_check
          %p296 = pneg %p47
        $region50: #{tpu_custom_call.1} parent=47 // pred_check_branch
          %298 = sbr.rel (%p296) target = $region52
        $region51: #{tpu_custom_call.1} parent=47 // pred_region
          %299 = dma.done %s292, 128
        $region52: #{tpu_custom_call.1} parent=47 // pred_fallthru
          _
        // Predicated region
        $region53: #{tpu_custom_call.1} parent=47 // pred_check
          %p300 = pneg %p68
        $region54: #{tpu_custom_call.1} parent=47 // pred_check_branch
          %302 = sbr.rel (%p300) target = $region56
        $region55: #{tpu_custom_call.1} parent=47 // pred_region
          %303 = dma.done [#allocation6], 384
        $region56: #{tpu_custom_call.1} parent=47 // pred_fallthru
          _
        // Predicated region
        $region57: #{tpu_custom_call.1} parent=47 // pred_check
          %p304 = pneg %p110
        $region58: #{tpu_custom_call.1} parent=47 // pred_check_branch
          %306 = sbr.rel (%p304) target = $region60
        $region59: #{tpu_custom_call.1} parent=47 // pred_region
          %307 = dma.done [#allocation6], 1024
        $region60: #{tpu_custom_call.1} parent=47 // pred_fallthru
          _
        // Predicated region
        $region61: #{tpu_custom_call.1} parent=47 // pred_check
          %p308 = pneg %p152
        $region62: #{tpu_custom_call.1} parent=47 // pred_check_branch
          %310 = sbr.rel (%p308) target = $region64
        $region63: #{tpu_custom_call.1} parent=47 // pred_region
          %311 = dma.done [#allocation9], 1024
        $region64: #{tpu_custom_call.1} parent=47 // pred_fallthru
          _
        %s312 = sand.u32 %s34, 1
        %s313 = scalar_lea.sflag [#allocation3], %s312
        %s314 = sand.u32 %s34, 1
        %s315 = smul.addr %s314, 8
        %s316 = scalar_lea.vmem [#allocation2], %s315
        %p317 = pneg %p47
        %p318 = pneg %p44
        %p319 = pneg %p68
        %p320 = pneg %p65
        %p321 = pneg %p89
        %p322 = pneg %p86
        %p323 = pneg %p110
        %p324 = pneg %p107
        %p325 = pneg %p131
        %p326 = pneg %p128
        %p327 = pneg %p152
        %p328 = pneg %p149
        %p329 = pneg %p173
        %p330 = pneg %p170
        %p331 = pneg %p199
        %p332 = pneg %p196
        %s333 = sand.u32 %s186, 1
        %s334 = scalar_lea.sflag [#allocation4], %s333
        %s335 = sand.u32 %s186, 1
        %s336 = smul.addr %s335, 8
        %s337 = scalar_lea.vmem [#allocation10], %s336
        %v339 = vld [vmem:[%s295] sm:$0xff]
        %v340 = vpack.c.bf16 %v339, %v339
        %v341 = vld [vmem:[#allocation5] sm:$0xf]
        %v342 = vld [vmem:[#allocation5 + $0x4] sm:$0xf]
        %v343 = vld [vmem:[#allocation5 + $0x8] sm:$0xf]
        %v344 = vld [vmem:[#allocation5 + $0xc] sm:$0xf]
        %v345 = vld [vmem:[#allocation5 + $0x10] sm:$0xf]
        %v346 = vld [vmem:[#allocation5 + $0x14] sm:$0xf]
        %v347 = vld [vmem:[%s2] sm:$0x1]
        %v349 = vlaneseq
        %v350 = vshrl.u32 %v349, 7
        %v351 = vsub.s32 0, %v350
        %v352 = vrot.slane %v347, %v351
        %v360 = vunpack.c.l.b16 %v341
        %v361 = vunpack.c.l.b16 %v342
        %v362 = vunpack.c.l.b16 %v343
        %v363 = vunpack.c.l.b16 %v344
        %v364 = vunpack.c.l.b16 %v345
        %v365 = vunpack.c.l.b16 %v346
        %v366 = vpack.c.b16 %v361, %v360
        %v367 = vpack.c.b16 %v363, %v362
        %v368 = vpack.c.b16 %v365, %v364
        %vm372 = vcmask 392192
        %v374 = vsel %vm372, %v340, 0
        %376 = vmatprep.subr.bf16.mxu0 0
        %377 = vmatpush1.bf16.msra.mxu0 %v366
        %378 = vmatprep.subr.bf16.mxu0 0
        %379 = vmatpush1.bf16.msra.mxu0 %v367
        %380 = vmatprep.subr.bf16.mxu0 0
        %381 = vmatpush1.bf16.msra.mxu0 %v368
        %382 = vmatprep.subr.bf16.mxu0 0
        %383 = vmatpush1.bf16.msra.mxu0 0
        %384 = vmatprep.subr.bf16.mxu0 0
        %385 = vmatpush1.bf16.msra.mxu0 0
        %386 = vmatprep.subr.bf16.mxu0 0
        %387 = vmatpush1.bf16.msra.mxu0 0
        %388 = vmatprep.subr.bf16.mxu0 0
        %389 = vmatpush1.bf16.msra.mxu0 0
        %390 = vmatprep.subr.bf16.mxu0 0
        %391 = vmatpush1.bf16.msra.mxu0 0
        %392 = vmatprep.subr.bf16.mxu0 0
        %393 = vmatpush1.bf16.msra.mxu0 0
        %394 = vmatprep.subr.bf16.mxu0 0
        %395 = vmatpush1.bf16.msra.mxu0 0
        %396 = vmatprep.subr.bf16.mxu0 0
        %397 = vmatpush1.bf16.msra.mxu0 0
        %398 = vmatprep.subr.bf16.mxu0 0
        %399 = vmatpush1.bf16.msra.mxu0 0
        %400 = vmatprep.subr.bf16.mxu0 0
        %401 = vmatpush1.bf16.msra.mxu0 0
        %402 = vmatprep.subr.bf16.mxu0 0
        %403 = vmatpush1.bf16.msra.mxu0 0
        %404 = vmatprep.subr.bf16.mxu0 0
        %405 = vmatpush1.bf16.msra.mxu0 0
        %406 = vmatprep.subr.bf16.mxu0 0
        %407 = vmatpush1.bf16.msra.mxu0 0
        %408 = vmatprep.mubr.bf16.mxu0 0
        %409 = vmatmul.mubr.bf16.gmra.mrb[0].mxu0 %v374
        %v410 = vpop.f32.mrb[0].mxu0
        %v411 = vadd.f32 %v352, %v410
        %v412 = vpop.f32.mrb[0].mxu0
        %v413 = vpop.f32.mrb[0].mxu0
        %v414 = vpop.f32.mrb[0].mxu0
        %415 = vdwg.mxu0
        %vm416 = vcmp.gt.f32.partialorder %v411, 0.0
        %v417 = vmul.f32 %v411, 0.01
        %v418 = vsel %vm416, %v411, %v417
        %v419 = vpack.c.bf16 %v418, %v418
        %v420 = vld [vmem:[#allocation7] sm:$0xf]
        %v421 = vld [vmem:[#allocation7 + $0x4] sm:$0xf]
        %v422 = vld [vmem:[#allocation7 + $0x8] sm:$0xf]
        %v423 = vld [vmem:[#allocation7 + $0xc] sm:$0xf]
        %v424 = vld [vmem:[#allocation7 + $0x10] sm:$0xf]
        %v425 = vld [vmem:[#allocation7 + $0x14] sm:$0xf]
        %v426 = vld [vmem:[#allocation7 + $0x18] sm:$0xf]
        %v427 = vld [vmem:[#allocation7 + $0x1c] sm:$0xf]
        %v428 = vld [vmem:[#allocation7 + $0x20] sm:$0xf]
        %v429 = vld [vmem:[#allocation7 + $0x24] sm:$0xf]
        %v430 = vld [vmem:[#allocation7 + $0x28] sm:$0xf]
        %v431 = vld [vmem:[#allocation7 + $0x2c] sm:$0xf]
        %v432 = vld [vmem:[#allocation7 + $0x30] sm:$0xf]
        %v433 = vld [vmem:[#allocation7 + $0x34] sm:$0xf]
        %v434 = vld [vmem:[#allocation7 + $0x38] sm:$0xf]
        %v435 = vld [vmem:[#allocation7 + $0x3c] sm:$0xf]
        %v436 = vld [vmem:[%s4] sm:$0x1]
        %v438 = vlaneseq
        %v439 = vshrl.u32 %v438, 7
        %v440 = vsub.s32 0, %v439
        %v441 = vrot.slane %v436, %v440
        %v459 = vunpack.c.l.b16 %v420
        %v460 = vunpack.c.l.b16 %v421
        %v461 = vunpack.c.l.b16 %v422
        %v462 = vunpack.c.l.b16 %v423
        %v463 = vunpack.c.l.b16 %v424
        %v464 = vunpack.c.l.b16 %v425
        %v465 = vunpack.c.l.b16 %v426
        %v466 = vunpack.c.l.b16 %v427
        %v467 = vunpack.c.l.b16 %v428
        %v468 = vunpack.c.l.b16 %v429
        %v469 = vunpack.c.l.b16 %v430
        %v470 = vunpack.c.l.b16 %v431
        %v471 = vunpack.c.l.b16 %v432
        %v472 = vunpack.c.l.b16 %v433
        %v473 = vunpack.c.l.b16 %v434
        %v474 = vunpack.c.l.b16 %v435
        %v475 = vpack.c.b16 %v460, %v459
        %v476 = vpack.c.b16 %v462, %v461
        %v477 = vpack.c.b16 %v464, %v463
        %v478 = vpack.c.b16 %v466, %v465
        %v479 = vpack.c.b16 %v468, %v467
        %v480 = vpack.c.b16 %v470, %v469
        %v481 = vpack.c.b16 %v472, %v471
        %v482 = vpack.c.b16 %v474, %v473
        %491 = vmatprep.subr.bf16.mxu0 0
        %492 = vmatpush1.bf16.msra.mxu0 %v475
        %493 = vmatprep.subr.bf16.mxu0 0
        %494 = vmatpush1.bf16.msra.mxu0 %v476
        %495 = vmatprep.subr.bf16.mxu0 0
        %496 = vmatpush1.bf16.msra.mxu0 %v477
        %497 = vmatprep.subr.bf16.mxu0 0
        %498 = vmatpush1.bf16.msra.mxu0 %v478
        %499 = vmatprep.subr.bf16.mxu0 0
        %500 = vmatpush1.bf16.msra.mxu0 %v479
        %501 = vmatprep.subr.bf16.mxu0 0
        %502 = vmatpush1.bf16.msra.mxu0 %v480
        %503 = vmatprep.subr.bf16.mxu0 0
        %504 = vmatpush1.bf16.msra.mxu0 %v481
        %505 = vmatprep.subr.bf16.mxu0 0
        %506 = vmatpush1.bf16.msra.mxu0 %v482
        %507 = vmatprep.subr.bf16.mxu0 0
        %508 = vmatpush1.bf16.msra.mxu0 0
        %509 = vmatprep.subr.bf16.mxu0 0
        %510 = vmatpush1.bf16.msra.mxu0 0
        %511 = vmatprep.subr.bf16.mxu0 0
        %512 = vmatpush1.bf16.msra.mxu0 0
        %513 = vmatprep.subr.bf16.mxu0 0
        %514 = vmatpush1.bf16.msra.mxu0 0
        %515 = vmatprep.subr.bf16.mxu0 0
        %516 = vmatpush1.bf16.msra.mxu0 0
        %517 = vmatprep.subr.bf16.mxu0 0
        %518 = vmatpush1.bf16.msra.mxu0 0
        %519 = vmatprep.subr.bf16.mxu0 0
        %520 = vmatpush1.bf16.msra.mxu0 0
        %521 = vmatprep.subr.bf16.mxu0 0
        %522 = vmatpush1.bf16.msra.mxu0 0
        %523 = vmatprep.mubr.bf16.mxu0 0
        %524 = vmatmul.mubr.bf16.gmra.mrb[0].mxu0 %v419
        %v525 = vpop.f32.mrb[0].mxu0
        %v526 = vadd.f32 %v441, %v525
        %v527 = vpop.f32.mrb[0].mxu0
        %v528 = vpop.f32.mrb[0].mxu0
        %v529 = vpop.f32.mrb[0].mxu0
        %530 = vdwg.mxu0
        %vm531 = vcmp.gt.f32.partialorder %v526, 0.0
        %v532 = vmul.f32 %v526, 0.01
        %v533 = vsel %vm531, %v526, %v532
        %v534 = vpack.c.bf16 %v533, %v533
        %v535 = vld [vmem:[#allocation8] sm:$0xf]
        %v536 = vld [vmem:[#allocation8 + $0x4] sm:$0xf]
        %v537 = vld [vmem:[#allocation8 + $0x8] sm:$0xf]
        %v538 = vld [vmem:[#allocation8 + $0xc] sm:$0xf]
        %v539 = vld [vmem:[#allocation8 + $0x10] sm:$0xf]
        %v540 = vld [vmem:[#allocation8 + $0x14] sm:$0xf]
        %v541 = vld [vmem:[#allocation8 + $0x18] sm:$0xf]
        %v542 = vld [vmem:[#allocation8 + $0x1c] sm:$0xf]
        %v543 = vld [vmem:[#allocation8 + $0x20] sm:$0xf]
        %v544 = vld [vmem:[#allocation8 + $0x24] sm:$0xf]
        %v545 = vld [vmem:[#allocation8 + $0x28] sm:$0xf]
        %v546 = vld [vmem:[#allocation8 + $0x2c] sm:$0xf]
        %v547 = vld [vmem:[#allocation8 + $0x30] sm:$0xf]
        %v548 = vld [vmem:[#allocation8 + $0x34] sm:$0xf]
        %v549 = vld [vmem:[#allocation8 + $0x38] sm:$0xf]
        %v550 = vld [vmem:[#allocation8 + $0x3c] sm:$0xf]
        %v551 = vld [vmem:[%s6] sm:$0x1]
        %v553 = vlaneseq
        %v554 = vshrl.u32 %v553, 7
        %v555 = vsub.s32 0, %v554
        %v556 = vrot.slane %v551, %v555
        %v574 = vunpack.c.l.b16 %v535
        %v575 = vunpack.c.l.b16 %v536
        %v576 = vunpack.c.l.b16 %v537
        %v577 = vunpack.c.l.b16 %v538
        %v578 = vunpack.c.l.b16 %v539
        %v579 = vunpack.c.l.b16 %v540
        %v580 = vunpack.c.l.b16 %v541
        %v581 = vunpack.c.l.b16 %v542
        %v582 = vunpack.c.l.b16 %v543
        %v583 = vunpack.c.l.b16 %v544
        %v584 = vunpack.c.l.b16 %v545
        %v585 = vunpack.c.l.b16 %v546
        %v586 = vunpack.c.l.b16 %v547
        %v587 = vunpack.c.l.b16 %v548
        %v588 = vunpack.c.l.b16 %v549
        %v589 = vunpack.c.l.b16 %v550
        %v590 = vpack.c.b16 %v575, %v574
        %v591 = vpack.c.b16 %v577, %v576
        %v592 = vpack.c.b16 %v579, %v578
        %v593 = vpack.c.b16 %v581, %v580
        %v594 = vpack.c.b16 %v583, %v582
        %v595 = vpack.c.b16 %v585, %v584
        %v596 = vpack.c.b16 %v587, %v586
        %v597 = vpack.c.b16 %v589, %v588
        %606 = vmatprep.subr.bf16.mxu0 0
        %607 = vmatpush1.bf16.msra.mxu0 %v590
        %608 = vmatprep.subr.bf16.mxu0 0
        %609 = vmatpush1.bf16.msra.mxu0 %v591
        %610 = vmatprep.subr.bf16.mxu0 0
        %611 = vmatpush1.bf16.msra.mxu0 %v592
        %612 = vmatprep.subr.bf16.mxu0 0
        %613 = vmatpush1.bf16.msra.mxu0 %v593
        %614 = vmatprep.subr.bf16.mxu0 0
        %615 = vmatpush1.bf16.msra.mxu0 %v594
        %616 = vmatprep.subr.bf16.mxu0 0
        %617 = vmatpush1.bf16.msra.mxu0 %v595
        %618 = vmatprep.subr.bf16.mxu0 0
        %619 = vmatpush1.bf16.msra.mxu0 %v596
        %620 = vmatprep.subr.bf16.mxu0 0
        %621 = vmatpush1.bf16.msra.mxu0 %v597
        %622 = vmatprep.subr.bf16.mxu0 0
        %623 = vmatpush1.bf16.msra.mxu0 0
        %624 = vmatprep.subr.bf16.mxu0 0
        %625 = vmatpush1.bf16.msra.mxu0 0
        %626 = vmatprep.subr.bf16.mxu0 0
        %627 = vmatpush1.bf16.msra.mxu0 0
        %628 = vmatprep.subr.bf16.mxu0 0
        %629 = vmatpush1.bf16.msra.mxu0 0
        %630 = vmatprep.subr.bf16.mxu0 0
        %631 = vmatpush1.bf16.msra.mxu0 0
        %632 = vmatprep.subr.bf16.mxu0 0
        %633 = vmatpush1.bf16.msra.mxu0 0
        %634 = vmatprep.subr.bf16.mxu0 0
        %635 = vmatpush1.bf16.msra.mxu0 0
        %636 = vmatprep.subr.bf16.mxu0 0
        %637 = vmatpush1.bf16.msra.mxu0 0
        %638 = vmatprep.mubr.bf16.mxu0 0
        %639 = vmatmul.mubr.bf16.gmra.mrb[0].mxu0 %v534
        %v640 = vpop.f32.mrb[0].mxu0
        %v641 = vadd.f32 %v556, %v640
        %v642 = vpop.f32.mrb[0].mxu0
        %v643 = vpop.f32.mrb[0].mxu0
        %v644 = vpop.f32.mrb[0].mxu0
        %645 = vdwg.mxu0
        %646 = vst [vmem:[%s337] sm:$0xff] %v641
        %s647 = sand.u32 %s186, 1
        %s648 = scalar_lea.sflag [#allocation4], %s647
        %s649 = sand.u32 %s186, 1
        %s650 = smul.addr %s649, 8
        %s651 = scalar_lea.vmem [#allocation10], %s650
        // Predicated region
        $region65: #{tpu_custom_call.1} parent=47 // pred_check
          %p652 = pneg %p196
        $region66: #{tpu_custom_call.1} parent=47 // pred_check_branch
          %654 = sbr.rel (%p652) target = $region68
        $region67: #{tpu_custom_call.1} parent=47 // pred_region
          %s656 = ssub.s32 128, 128
          %657 = vsyncadd %s648, %s656
          %s658 = smul.addr %s26, 128
          %s659 = scalar_lea.hbm %s7, %s658
          %s661 = sshll.u32 %s651, 4
          %s662 = int_to_ptr.vmem [resolvable:$true] %s661
          %664 = dma.vmem_to_hbm [thread:$0]  %s662, 128, %s659, %s648
        $region68: #{tpu_custom_call.1} parent=47 // pred_fallthru
          _
      $region48: #{tpu_custom_call.1} parent=5 // pred_fallthru
        _
      %p665 = scmp.le.s32.totalorder 2, %s21
      // Predicated region
      $region69: #{tpu_custom_call.1} parent=5 // pred_check
        %p666 = pneg %p665
      $region70: #{tpu_custom_call.1} parent=5 // pred_check_branch
        %668 = sbr.rel (%p666) target = $region72
      $region71: #{tpu_custom_call.1} parent=5 // pred_region
        %s669 = ssub.s32 %s21, 2
        // Predicated region
        $region73: #{tpu_custom_call.1} parent=71 // pred_check
          %p670 = pneg %p202
        $region74: #{tpu_custom_call.1} parent=71 // pred_check_branch
          %672 = sbr.rel (%p670) target = $region76
        $region75: #{tpu_custom_call.1} parent=71 // pred_region
          %s673 = sand.u32 %s187, 1
          %s674 = scalar_lea.sflag [#allocation4], %s673
          %s675 = sand.u32 %s187, 1
          %s676 = smul.addr %s675, 8
          %s677 = scalar_lea.vmem [#allocation10], %s676
          %678 = dma.done %s674, 128
        $region76: #{tpu_custom_call.1} parent=71 // pred_fallthru
          _
      $region72: #{tpu_custom_call.1} parent=5 // pred_fallthru
        _
    $region6: #{tpu_custom_call.1} parent=1 // loop_footer
      %s25 = sadd.s32 1, %s21
    $region7: #{tpu_custom_call.1} parent=1 // loop_footer_branch
      %20 = sbr.rel target = $region3
    $region8: #{tpu_custom_call.1} parent=1 // loop_exit
      _
    %679 = vsyncpa [#allocation3], 1
    %s680 = scalar_lea.sflag [#allocation3], 1
    %681 = vsyncpa %s680, 1
    %682 = vsyncpa [#allocation6], 1
    %683 = vsyncpa [#allocation9], 1
    %684 = vsyncpa [#allocation4], 1
    %s685 = scalar_lea.sflag [#allocation4], 1
    %686 = vsyncpa %s685, 1

// kernel: tpu_custom_call.1
$region0: #{tpu_custom_call.1}
  #allocation0 [shape = 'u32[]', space=smem, size = 0x4, offset = 0x4, fixed_abs, tag = 'smem constant byte address 0x4 - core index']
  #allocation1 [shape = 'u32[144,128]{1,0:T(1,128)}', space=vmem, size = 0x12000, scoped, tag = 'internal scratch']
  %s0 = inlined_call_operand.hbm [shape: f32[16,48], index: 0, kind: input, shape index: {}]
  %s1 = inlined_call_operand.hbm [shape: bf16[48,128], index: 1, kind: input, shape index: {}]
  %s2 = inlined_call_operand.vmem [shape: f32[1,128], index: 2, kind: input, shape index: {}]
  %s3 = inlined_call_operand.hbm [shape: bf16[128,128], index: 3, kind: input, shape index: {}]
  %s4 = inlined_call_operand.vmem [shape: f32[1,128], index: 4, kind: input, shape index: {}]
  %s5 = inlined_call_operand.hbm [shape: bf16[128,128], index: 5, kind: input, shape index: {}]
  %s6 = inlined_call_operand.vmem [shape: f32[1,128], index: 6, kind: input, shape index: {}]
  %s7 = inlined_call_operand.hbm [shape: f32[16,128], index: 7, kind: output, shape index: {}]
  %s8 = sld [smem:[#allocation0]]
  $region77: #{tpu_custom_call.1} parent=0
    _
  %s10 = ssub.s32 1, %s8
  %s11 = scalar_select 0, %s10, %s8
  $region1: #{tpu_custom_call.1} parent=0
    #allocation2 [shape = 'u8[8192]{0}', space=vmem, size = 0x2000, scoped, tag = 'input window, operand 0']
    #allocation3 [shape = 's32[2]{0}', space=sflag, size = 0x8, scoped, tag = 'scoped memory for tpu_custom_call.1']
    #allocation4 [shape = 's32[2]{0}', space=sflag, size = 0x8, scoped, tag = 'scoped memory for tpu_custom_call.1']
    #allocation5 [shape = 'u8[12288]{0}', space=vmem, size = 0x3000, scoped, tag = 'input window, operand 1, single buffered']
    #allocation6 [shape = 's32[1]{0}', space=sflag, size = 0x4, scoped, tag = 'scoped memory for tpu_custom_call.1']
    #allocation7 [shape = 'u8[32768]{0}', space=vmem, size = 0x8000, scoped, tag = 'input window, operand 3, single buffered']
    #allocation8 [shape = 'u8[32768]{0}', space=vmem, size = 0x8000, scoped, tag = 'input window, operand 5, single buffered']
    #allocation9 [shape = 's32[1]{0}', space=sflag, size = 0x4, scoped, tag = 'scoped memory for tpu_custom_call.1']
    #allocation10 [shape = 'u8[8192]{0}', space=vmem, size = 0x2000, scoped, tag = 'output window, operand 0']
    %12 = vsyncpa [#allocation3], 0
    %s13 = scalar_lea.sflag [#allocation3], 1
    %14 = vsyncpa %s13, 0
    %15 = vsyncpa [#allocation6], 0
    %16 = vsyncpa [#allocation9], 0
    %17 = vsyncpa [#allocation4], 0
    %s18 = scalar_lea.sflag [#allocation4], 1
    %19 = vsyncpa %s18, 0
    loop: start=0, step=1, limit=4
    $region2: #{tpu_custom_call.1} parent=1 // loop_pre_header
      _
    $region3: #{tpu_custom_call.1} parent=1 // loop_header
      %s21 = sphi 0, %s25
      %p22 = scmp.ge.s32.totalorder %s21, 4
      %s31 = sphi 0, %s33
      %s34 = sphi 0, %s31
      %s35 = sphi 0, %s34
      %s51 = sphi 0, %s35
      %s55 = sphi 0, %s55
      %s57 = sphi 0, %s55
      %s58 = sphi 0, %s57
      %s72 = sphi 0, %s58
      %s76 = sphi 0, %s76
      %s78 = sphi 0, %s76
      %s79 = sphi 0, %s78
      %s93 = sphi 0, %s79
      %s97 = sphi 0, %s97
      %s99 = sphi 0, %s97
      %s100 = sphi 0, %s99
      %s114 = sphi 0, %s100
      %s118 = sphi 0, %s118
      %s120 = sphi 0, %s118
      %s121 = sphi 0, %s120
      %s135 = sphi 0, %s121
      %s139 = sphi 0, %s139
      %s141 = sphi 0, %s139
      %s142 = sphi 0, %s141
      %s156 = sphi 0, %s142
      %s160 = sphi 0, %s160
      %s162 = sphi 0, %s160
      %s163 = sphi 0, %s162
      %s177 = sphi 0, %s163
      %s183 = sphi 0, %s185
      %s186 = sphi 0, %s183
      %s187 = sphi 0, %s186
      %s203 = sphi 0, %s187
    $region4: #{tpu_custom_call.1} parent=1 // loop_header_branch
      %24 = sbr.rel (%p22) target = $region8
    $region5: #{tpu_custom_call.1} parent=1 // loop_body
      %s26 = ssub.s32 %s21, 1
      %s27 = ssub.s32 %s21, 2
      %s28 = sadd.s32 %s21, 1
      %s29 = ssub.s32 %s21, %s28
      %p30 = scmp.eq.s32.totalorder %s29, 0
      %s32 = sadd.s32 %s31, 1
      %s33 = scalar_select %p30, %s31, %s32
      %p36 = pneg %p30
      %p37 = scmp.eq.s32.totalorder %s21, 1
      %p38 = por %p36, %p37
      %p39 = scmp.ne.s32.totalorder %s31, %s34
      %p40 = scmp.eq.s32.totalorder %s21, 0
      %p41 = por %p39, %p40
      %p42 = scmp.ne.s32.totalorder %s31, %s34
      %p43 = scmp.eq.s32.totalorder %s26, 1
      %p44 = por %p42, %p43
      %p45 = scmp.ne.s32.totalorder %s34, %s35
      %p46 = scmp.eq.s32.totalorder %s26, 0
      %p47 = por %p45, %p46
      %p48 = scmp.ne.s32.totalorder %s34, %s35
      %p49 = scmp.eq.s32.totalorder %s27, 1
      %p50 = por %p48, %p49
      %p52 = scmp.ne.s32.totalorder %s35, %s51
      %p53 = scmp.eq.s32.totalorder %s27, 0
      %p54 = por %p52, %p53
      %s56 = sadd.s32 %s55, 1
      %p59 = scmp.eq.s32.totalorder %s21, 1
      %p60 = scmp.ne.s32.totalorder %s55, %s57
      %p61 = scmp.eq.s32.totalorder %s21, 0
      %p62 = por %p60, %p61
      %p63 = scmp.ne.s32.totalorder %s55, %s57
      %p64 = scmp.eq.s32.totalorder %s26, 1
      %p65 = por %p63, %p64
      %p66 = scmp.ne.s32.totalorder %s57, %s58
      %p67 = scmp.eq.s32.totalorder %s26, 0
      %p68 = por %p66, %p67
      %p69 = scmp.ne.s32.totalorder %s57, %s58
      %p70 = scmp.eq.s32.totalorder %s27, 1
      %p71 = por %p69, %p70
      %p73 = scmp.ne.s32.totalorder %s58, %s72
      %p74 = scmp.eq.s32.totalorder %s27, 0
      %p75 = por %p73, %p74
      %s77 = sadd.s32 %s76, 1
      %p80 = scmp.eq.s32.totalorder %s21, 1
      %p81 = scmp.ne.s32.totalorder %s76, %s78
      %p82 = scmp.eq.s32.totalorder %s21, 0
      %p83 = por %p81, %p82
      %p84 = scmp.ne.s32.totalorder %s76, %s78
      %p85 = scmp.eq.s32.totalorder %s26, 1
      %p86 = por %p84, %p85
      %p87 = scmp.ne.s32.totalorder %s78, %s79
      %p88 = scmp.eq.s32.totalorder %s26, 0
      %p89 = por %p87, %p88
      %p90 = scmp.ne.s32.totalorder %s78, %s79
      %p91 = scmp.eq.s32.totalorder %s27, 1
      %p92 = por %p90, %p91
      %p94 = scmp.ne.s32.totalorder %s79, %s93
      %p95 = scmp.eq.s32.totalorder %s27, 0
      %p96 = por %p94, %p95
      %s98 = sadd.s32 %s97, 1
      %p101 = scmp.eq.s32.totalorder %s21, 1
      %p102 = scmp.ne.s32.totalorder %s97, %s99
      %p103 = scmp.eq.s32.totalorder %s21, 0
      %p104 = por %p102, %p103
      %p105 = scmp.ne.s32.totalorder %s97, %s99
      %p106 = scmp.eq.s32.totalorder %s26, 1
      %p107 = por %p105, %p106
      %p108 = scmp.ne.s32.totalorder %s99, %s100
      %p109 = scmp.eq.s32.totalorder %s26, 0
      %p110 = por %p108, %p109
      %p111 = scmp.ne.s32.totalorder %s99, %s100
      %p112 = scmp.eq.s32.totalorder %s27, 1
      %p113 = por %p111, %p112
      %p115 = scmp.ne.s32.totalorder %s100, %s114
      %p116 = scmp.eq.s32.totalorder %s27, 0
      %p117 = por %p115, %p116
      %s119 = sadd.s32 %s118, 1
      %p122 = scmp.eq.s32.totalorder %s21, 1
      %p123 = scmp.ne.s32.totalorder %s118, %s120
      %p124 = scmp.eq.s32.totalorder %s21, 0
      %p125 = por %p123, %p124
      %p126 = scmp.ne.s32.totalorder %s118, %s120
      %p127 = scmp.eq.s32.totalorder %s26, 1
      %p128 = por %p126, %p127
      %p129 = scmp.ne.s32.totalorder %s120, %s121
      %p130 = scmp.eq.s32.totalorder %s26, 0
      %p131 = por %p129, %p130
      %p132 = scmp.ne.s32.totalorder %s120, %s121
      %p133 = scmp.eq.s32.totalorder %s27, 1
      %p134 = por %p132, %p133
      %p136 = scmp.ne.s32.totalorder %s121, %s135
      %p137 = scmp.eq.s32.totalorder %s27, 0
      %p138 = por %p136, %p137
      %s140 = sadd.s32 %s139, 1
      %p143 = scmp.eq.s32.totalorder %s21, 1
      %p144 = scmp.ne.s32.totalorder %s139, %s141
      %p145 = scmp.eq.s32.totalorder %s21, 0
      %p146 = por %p144, %p145
      %p147 = scmp.ne.s32.totalorder %s139, %s141
      %p148 = scmp.eq.s32.totalorder %s26, 1
      %p149 = por %p147, %p148
      %p150 = scmp.ne.s32.totalorder %s141, %s142
      %p151 = scmp.eq.s32.totalorder %s26, 0
      %p152 = por %p150, %p151
      %p153 = scmp.ne.s32.totalorder %s141, %s142
      %p154 = scmp.eq.s32.totalorder %s27, 1
      %p155 = por %p153, %p154
      %p157 = scmp.ne.s32.totalorder %s142, %s156
      %p158 = scmp.eq.s32.totalorder %s27, 0
      %p159 = por %p157, %p158
      %s161 = sadd.s32 %s160, 1
      %p164 = scmp.eq.s32.totalorder %s21, 1
      %p165 = scmp.ne.s32.totalorder %s160, %s162
      %p166 = scmp.eq.s32.totalorder %s21, 0
      %p167 = por %p165, %p166
      %p168 = scmp.ne.s32.totalorder %s160, %s162
      %p169 = scmp.eq.s32.totalorder %s26, 1
      %p170 = por %p168, %p169
      %p171 = scmp.ne.s32.totalorder %s162, %s163
      %p172 = scmp.eq.s32.totalorder %s26, 0
      %p173 = por %p171, %p172
      %p174 = scmp.ne.s32.totalorder %s162, %s163
      %p175 = scmp.eq.s32.totalorder %s27, 1
      %p176 = por %p174, %p175
      %p178 = scmp.ne.s32.totalorder %s163, %s177
      %p179 = scmp.eq.s32.totalorder %s27, 0
      %p180 = por %p178, %p179
      %s181 = ssub.s32 %s21, %s28
      %p182 = scmp.eq.s32.totalorder %s181, 0
      %s184 = sadd.s32 %s183, 1
      %s185 = scalar_select %p182, %s183, %s184
      %p188 = pneg %p182
      %p189 = scmp.eq.s32.totalorder %s21, 1
      %p190 = por %p188, %p189
      %p191 = scmp.ne.s32.totalorder %s183, %s186
      %p192 = scmp.eq.s32.totalorder %s21, 0
      %p193 = por %p191, %p192
      %p194 = scmp.ne.s32.totalorder %s183, %s186
      %p195 = scmp.eq.s32.totalorder %s26, 1
      %p196 = por %p194, %p195
      %p197 = scmp.ne.s32.totalorder %s186, %s187
      %p198 = scmp.eq.s32.totalorder %s26, 0
      %p199 = por %p197, %p198
      %p200 = scmp.ne.s32.totalorder %s186, %s187
      %p201 = scmp.eq.s32.totalorder %s27, 1
      %p202 = por %p200, %p201
      %p204 = scmp.ne.s32.totalorder %s187, %s203
      %p205 = scmp.eq.s32.totalorder %s27, 0
      %p206 = por %p204, %p205
      %p207 = scmp.le.s32.totalorder 1, %s21
      %p208 = scmp.lt.s32.totalorder %s21, 3
      %p209 = pnand %p207, %p208
      %p210 = pneg %p209
      // Predicated region
      $region9: #{tpu_custom_call.1} parent=5 // pred_check
        _
      $region10: #{tpu_custom_call.1} parent=5 // pred_check_branch
        %212 = sbr.rel (%p209) target = $region12
      $region11: #{tpu_custom_call.1} parent=5 // pred_region
        %s213 = ssub.s32 %s21, 1
        // Predicated region
        $region13: #{tpu_custom_call.1} parent=11 // pred_check
          %p214 = pneg %p68
        $region14: #{tpu_custom_call.1} parent=11 // pred_check_branch
          %216 = sbr.rel (%p214) target = $region16
        $region15: #{tpu_custom_call.1} parent=11 // pred_region
          %s218 = ssub.s32 384, 384
          %219 = vsyncadd [#allocation6], %s218
          %s220 = sshll.u32 [#allocation5], 4
          %s221 = int_to_ptr.vmem [resolvable:$true] %s220
          %226 = dma.hbm_to_vmem [thread:$0]  %s1, 384, %s221, [#allocation6], 64, 64, 4
        $region16: #{tpu_custom_call.1} parent=11 // pred_fallthru
          _
        // Predicated region
        $region17: #{tpu_custom_call.1} parent=11 // pred_check
          %p227 = pneg %p89
        $region18: #{tpu_custom_call.1} parent=11 // pred_check_branch
          %229 = sbr.rel (%p227) target = $region20
        $region19: #{tpu_custom_call.1} parent=11 // pred_region
          _
        $region20: #{tpu_custom_call.1} parent=11 // pred_fallthru
          _
        // Predicated region
        $region21: #{tpu_custom_call.1} parent=11 // pred_check
          %p230 = pneg %p110
        $region22: #{tpu_custom_call.1} parent=11 // pred_check_branch
          %232 = sbr.rel (%p230) target = $region24
        $region23: #{tpu_custom_call.1} parent=11 // pred_region
          %s234 = ssub.s32 1024, 1024
          %235 = vsyncadd [#allocation6], %s234
          %s236 = sshll.u32 [#allocation7], 4
          %s237 = int_to_ptr.vmem [resolvable:$true] %s236
          %242 = dma.hbm_to_vmem [thread:$0]  %s3, 1024, %s237, [#allocation6], 64, 64, 4
        $region24: #{tpu_custom_call.1} parent=11 // pred_fallthru
          _
        // Predicated region
        $region25: #{tpu_custom_call.1} parent=11 // pred_check
          %p243 = pneg %p131
        $region26: #{tpu_custom_call.1} parent=11 // pred_check_branch
          %245 = sbr.rel (%p243) target = $region28
        $region27: #{tpu_custom_call.1} parent=11 // pred_region
          _
        $region28: #{tpu_custom_call.1} parent=11 // pred_fallthru
          _
        // Predicated region
        $region29: #{tpu_custom_call.1} parent=11 // pred_check
          %p246 = pneg %p152
        $region30: #{tpu_custom_call.1} parent=11 // pred_check_branch
          %248 = sbr.rel (%p246) target = $region32
        $region31: #{tpu_custom_call.1} parent=11 // pred_region
          %s250 = ssub.s32 1024, 1024
          %251 = vsyncadd [#allocation9], %s250
          %s252 = sshll.u32 [#allocation8], 4
          %s253 = int_to_ptr.vmem [resolvable:$true] %s252
          %258 = dma.hbm_to_vmem [thread:$0]  %s5, 1024, %s253, [#allocation9], 64, 64, 4
        $region32: #{tpu_custom_call.1} parent=11 // pred_fallthru
          _
        // Predicated region
        $region33: #{tpu_custom_call.1} parent=11 // pred_check
          %p259 = pneg %p173
        $region34: #{tpu_custom_call.1} parent=11 // pred_check_branch
          %261 = sbr.rel (%p259) target = $region36
        $region35: #{tpu_custom_call.1} parent=11 // pred_region
          _
        $region36: #{tpu_custom_call.1} parent=11 // pred_fallthru
          _
      $region12: #{tpu_custom_call.1} parent=5 // pred_fallthru
        _
      %p262 = scmp.lt.s32.totalorder %s21, 2
      // Predicated region
      $region37: #{tpu_custom_call.1} parent=5 // pred_check
        %p263 = pneg %p262
      $region38: #{tpu_custom_call.1} parent=5 // pred_check_branch
        %265 = sbr.rel (%p263) target = $region40
      $region39: #{tpu_custom_call.1} parent=5 // pred_region
        // Predicated region
        $region41: #{tpu_custom_call.1} parent=39 // pred_check
          %p266 = pneg %p41
        $region42: #{tpu_custom_call.1} parent=39 // pred_check_branch
          %268 = sbr.rel (%p266) target = $region44
        $region43: #{tpu_custom_call.1} parent=39 // pred_region
          %s269 = sand.u32 %s31, 1
          %s270 = scalar_lea.sflag [#allocation3], %s269
          %s271 = sand.u32 %s31, 1
          %s272 = smul.addr %s271, 8
          %s273 = scalar_lea.vmem [#allocation2], %s272
          %s275 = ssub.s32 128, 128
          %276 = vsyncadd %s270, %s275
          %s277 = smul.addr %s21, 128
          %s278 = scalar_lea.hbm %s0, %s277
          %s280 = sshll.u32 %s273, 4
          %s281 = int_to_ptr.vmem [resolvable:$true] %s280
          %283 = dma.hbm_to_vmem [thread:$0]  %s278, 128, %s281, %s270
        $region44: #{tpu_custom_call.1} parent=39 // pred_fallthru
          _
      $region40: #{tpu_custom_call.1} parent=5 // pred_fallthru
        _
      %p284 = scmp.le.s32.totalorder 1, %s21
      %p285 = scmp.lt.s32.totalorder %s21, 3
      %p286 = pnand %p284, %p285
      %p287 = pneg %p286
      // Predicated region
      $region45: #{tpu_custom_call.1} parent=5 // pred_check
        _
      $region46: #{tpu_custom_call.1} parent=5 // pred_check_branch
        %289 = sbr.rel (%p286) target = $region48
      $region47: #{tpu_custom_call.1} parent=5 // pred_region
        %s290 = ssub.s32 %s21, 1
        %s291 = sand.u32 %s34, 1
        %s292 = scalar_lea.sflag [#allocation3], %s291
        %s293 = sand.u32 %s34, 1
        %s294 = smul.addr %s293, 8
        %s295 = scalar_lea.vmem [#allocation2], %s294
        // Predicated region
        $region49: #{tpu_custom_call.1} parent=47 // pred_check
          %p296 = pneg %p47
        $region50: #{tpu_custom_call.1} parent=47 // pred_check_branch
          %298 = sbr.rel (%p296) target = $region52
        $region51: #{tpu_custom_call.1} parent=47 // pred_region
          %299 = dma.done %s292, 128
        $region52: #{tpu_custom_call.1} parent=47 // pred_fallthru
          _
        // Predicated region
        $region53: #{tpu_custom_call.1} parent=47 // pred_check
          %p300 = pneg %p68
        $region54: #{tpu_custom_call.1} parent=47 // pred_check_branch
          %302 = sbr.rel (%p300) target = $region56
        $region55: #{tpu_custom_call.1} parent=47 // pred_region
          %303 = dma.done [#allocation6], 384
        $region56: #{tpu_custom_call.1} parent=47 // pred_fallthru
          _
        // Predicated region
        $region57: #{tpu_custom_call.1} parent=47 // pred_check
          %p304 = pneg %p110
        $region58: #{tpu_custom_call.1} parent=47 // pred_check_branch
          %306 = sbr.rel (%p304) target = $region60
        $region59: #{tpu_custom_call.1} parent=47 // pred_region
          %307 = dma.done [#allocation6], 1024
        $region60: #{tpu_custom_call.1} parent=47 // pred_fallthru
          _
        // Predicated region
        $region61: #{tpu_custom_call.1} parent=47 // pred_check
          %p308 = pneg %p152
        $region62: #{tpu_custom_call.1} parent=47 // pred_check_branch
          %310 = sbr.rel (%p308) target = $region64
        $region63: #{tpu_custom_call.1} parent=47 // pred_region
          %311 = dma.done [#allocation9], 1024
        $region64: #{tpu_custom_call.1} parent=47 // pred_fallthru
          _
        %s312 = sand.u32 %s34, 1
        %s313 = scalar_lea.sflag [#allocation3], %s312
        %s314 = sand.u32 %s34, 1
        %s315 = smul.addr %s314, 8
        %s316 = scalar_lea.vmem [#allocation2], %s315
        %p317 = pneg %p47
        %p318 = pneg %p44
        %p319 = pneg %p68
        %p320 = pneg %p65
        %p321 = pneg %p89
        %p322 = pneg %p86
        %p323 = pneg %p110
        %p324 = pneg %p107
        %p325 = pneg %p131
        %p326 = pneg %p128
        %p327 = pneg %p152
        %p328 = pneg %p149
        %p329 = pneg %p173
        %p330 = pneg %p170
        %p331 = pneg %p199
        %p332 = pneg %p196
        %s333 = sand.u32 %s186, 1
        %s334 = scalar_lea.sflag [#allocation4], %s333
        %s335 = sand.u32 %s186, 1
        %s336 = smul.addr %s335, 8
        %s337 = scalar_lea.vmem [#allocation10], %s336
        %v339 = vld [vmem:[%s295] sm:$0xff]
        %v340 = vpack.c.bf16 %v339, %v339
        %v341 = vld [vmem:[#allocation5] sm:$0xf]
        %v342 = vld [vmem:[#allocation5 + $0x4] sm:$0xf]
        %v343 = vld [vmem:[#allocation5 + $0x8] sm:$0xf]
        %v344 = vld [vmem:[#allocation5 + $0xc] sm:$0xf]
        %v345 = vld [vmem:[#allocation5 + $0x10] sm:$0xf]
        %v346 = vld [vmem:[#allocation5 + $0x14] sm:$0xf]
        %v347 = vld [vmem:[%s2] sm:$0x1]
        %v349 = vlaneseq
        %v350 = vshrl.u32 %v349, 7
        %v351 = vsub.s32 0, %v350
        %v352 = vrot.slane %v347, %v351
        %v360 = vunpack.c.l.b16 %v341
        %v361 = vunpack.c.l.b16 %v342
        %v362 = vunpack.c.l.b16 %v343
        %v363 = vunpack.c.l.b16 %v344
        %v364 = vunpack.c.l.b16 %v345
        %v365 = vunpack.c.l.b16 %v346
        %v366 = vpack.c.b16 %v361, %v360
        %v367 = vpack.c.b16 %v363, %v362
        %v368 = vpack.c.b16 %v365, %v364
        %vm372 = vcmask 392192
        %v374 = vsel %vm372, %v340, 0
        %376 = vmatprep.subr.bf16.mxu0 0
        %377 = vmatpush1.bf16.msra.mxu0 %v366
        %378 = vmatprep.subr.bf16.mxu0 0
        %379 = vmatpush1.bf16.msra.mxu0 %v367
        %380 = vmatprep.subr.bf16.mxu0 0
        %381 = vmatpush1.bf16.msra.mxu0 %v368
        %382 = vmatprep.subr.bf16.mxu0 0
        %383 = vmatpush1.bf16.msra.mxu0 0
        %384 = vmatprep.subr.bf16.mxu0 0
        %385 = vmatpush1.bf16.msra.mxu0 0
        %386 = vmatprep.subr.bf16.mxu0 0
        %387 = vmatpush1.bf16.msra.mxu0 0
        %388 = vmatprep.subr.bf16.mxu0 0
        %389 = vmatpush1.bf16.msra.mxu0 0
        %390 = vmatprep.subr.bf16.mxu0 0
        %391 = vmatpush1.bf16.msra.mxu0 0
        %392 = vmatprep.subr.bf16.mxu0 0
        %393 = vmatpush1.bf16.msra.mxu0 0
        %394 = vmatprep.subr.bf16.mxu0 0
        %395 = vmatpush1.bf16.msra.mxu0 0
        %396 = vmatprep.subr.bf16.mxu0 0
        %397 = vmatpush1.bf16.msra.mxu0 0
        %398 = vmatprep.subr.bf16.mxu0 0
        %399 = vmatpush1.bf16.msra.mxu0 0
        %400 = vmatprep.subr.bf16.mxu0 0
        %401 = vmatpush1.bf16.msra.mxu0 0
        %402 = vmatprep.subr.bf16.mxu0 0
        %403 = vmatpush1.bf16.msra.mxu0 0
        %404 = vmatprep.subr.bf16.mxu0 0
        %405 = vmatpush1.bf16.msra.mxu0 0
        %406 = vmatprep.subr.bf16.mxu0 0
        %407 = vmatpush1.bf16.msra.mxu0 0
        %408 = vmatprep.mubr.bf16.mxu0 0
        %409 = vmatmul.mubr.bf16.gmra.mrb[0].mxu0 %v374
        %v410 = vpop.f32.mrb[0].mxu0
        %v411 = vadd.f32 %v352, %v410
        %v412 = vpop.f32.mrb[0].mxu0
        %v413 = vpop.f32.mrb[0].mxu0
        %v414 = vpop.f32.mrb[0].mxu0
        %415 = vdwg.mxu0
        %vm416 = vcmp.gt.f32.partialorder %v411, 0.0
        %v417 = vmul.f32 %v411, 0.01
        %v418 = vsel %vm416, %v411, %v417
        %v419 = vpack.c.bf16 %v418, %v418
        %v420 = vld [vmem:[#allocation7] sm:$0xf]
        %v421 = vld [vmem:[#allocation7 + $0x4] sm:$0xf]
        %v422 = vld [vmem:[#allocation7 + $0x8] sm:$0xf]
        %v423 = vld [vmem:[#allocation7 + $0xc] sm:$0xf]
        %v424 = vld [vmem:[#allocation7 + $0x10] sm:$0xf]
        %v425 = vld [vmem:[#allocation7 + $0x14] sm:$0xf]
        %v426 = vld [vmem:[#allocation7 + $0x18] sm:$0xf]
        %v427 = vld [vmem:[#allocation7 + $0x1c] sm:$0xf]
        %v428 = vld [vmem:[#allocation7 + $0x20] sm:$0xf]
        %v429 = vld [vmem:[#allocation7 + $0x24] sm:$0xf]
        %v430 = vld [vmem:[#allocation7 + $0x28] sm:$0xf]
        %v431 = vld [vmem:[#allocation7 + $0x2c] sm:$0xf]
        %v432 = vld [vmem:[#allocation7 + $0x30] sm:$0xf]
        %v433 = vld [vmem:[#allocation7 + $0x34] sm:$0xf]
        %v434 = vld [vmem:[#allocation7 + $0x38] sm:$0xf]
        %v435 = vld [vmem:[#allocation7 + $0x3c] sm:$0xf]
        %v436 = vld [vmem:[%s4] sm:$0x1]
        %v438 = vlaneseq
        %v439 = vshrl.u32 %v438, 7
        %v440 = vsub.s32 0, %v439
        %v441 = vrot.slane %v436, %v440
        %v459 = vunpack.c.l.b16 %v420
        %v460 = vunpack.c.l.b16 %v421
        %v461 = vunpack.c.l.b16 %v422
        %v462 = vunpack.c.l.b16 %v423
        %v463 = vunpack.c.l.b16 %v424
        %v464 = vunpack.c.l.b16 %v425
        %v465 = vunpack.c.l.b16 %v426
        %v466 = vunpack.c.l.b16 %v427
        %v467 = vunpack.c.l.b16 %v428
        %v468 = vunpack.c.l.b16 %v429
        %v469 = vunpack.c.l.b16 %v430
        %v470 = vunpack.c.l.b16 %v431
        %v471 = vunpack.c.l.b16 %v432
        %v472 = vunpack.c.l.b16 %v433
        %v473 = vunpack.c.l.b16 %v434
        %v474 = vunpack.c.l.b16 %v435
        %v475 = vpack.c.b16 %v460, %v459
        %v476 = vpack.c.b16 %v462, %v461
        %v477 = vpack.c.b16 %v464, %v463
        %v478 = vpack.c.b16 %v466, %v465
        %v479 = vpack.c.b16 %v468, %v467
        %v480 = vpack.c.b16 %v470, %v469
        %v481 = vpack.c.b16 %v472, %v471
        %v482 = vpack.c.b16 %v474, %v473
        %491 = vmatprep.subr.bf16.mxu0 0
        %492 = vmatpush1.bf16.msra.mxu0 %v475
        %493 = vmatprep.subr.bf16.mxu0 0
        %494 = vmatpush1.bf16.msra.mxu0 %v476
        %495 = vmatprep.subr.bf16.mxu0 0
        %496 = vmatpush1.bf16.msra.mxu0 %v477
        %497 = vmatprep.subr.bf16.mxu0 0
        %498 = vmatpush1.bf16.msra.mxu0 %v478
        %499 = vmatprep.subr.bf16.mxu0 0
        %500 = vmatpush1.bf16.msra.mxu0 %v479
        %501 = vmatprep.subr.bf16.mxu0 0
        %502 = vmatpush1.bf16.msra.mxu0 %v480
        %503 = vmatprep.subr.bf16.mxu0 0
        %504 = vmatpush1.bf16.msra.mxu0 %v481
        %505 = vmatprep.subr.bf16.mxu0 0
        %506 = vmatpush1.bf16.msra.mxu0 %v482
        %507 = vmatprep.subr.bf16.mxu0 0
        %508 = vmatpush1.bf16.msra.mxu0 0
        %509 = vmatprep.subr.bf16.mxu0 0
        %510 = vmatpush1.bf16.msra.mxu0 0
        %511 = vmatprep.subr.bf16.mxu0 0
        %512 = vmatpush1.bf16.msra.mxu0 0
        %513 = vmatprep.subr.bf16.mxu0 0
        %514 = vmatpush1.bf16.msra.mxu0 0
        %515 = vmatprep.subr.bf16.mxu0 0
        %516 = vmatpush1.bf16.msra.mxu0 0
        %517 = vmatprep.subr.bf16.mxu0 0
        %518 = vmatpush1.bf16.msra.mxu0 0
        %519 = vmatprep.subr.bf16.mxu0 0
        %520 = vmatpush1.bf16.msra.mxu0 0
        %521 = vmatprep.subr.bf16.mxu0 0
        %522 = vmatpush1.bf16.msra.mxu0 0
        %523 = vmatprep.mubr.bf16.mxu0 0
        %524 = vmatmul.mubr.bf16.gmra.mrb[0].mxu0 %v419
        %v525 = vpop.f32.mrb[0].mxu0
        %v526 = vadd.f32 %v441, %v525
        %v527 = vpop.f32.mrb[0].mxu0
        %v528 = vpop.f32.mrb[0].mxu0
        %v529 = vpop.f32.mrb[0].mxu0
        %530 = vdwg.mxu0
        %vm531 = vcmp.gt.f32.partialorder %v526, 0.0
        %v532 = vmul.f32 %v526, 0.01
        %v533 = vsel %vm531, %v526, %v532
        %v534 = vpack.c.bf16 %v533, %v533
        %v535 = vld [vmem:[#allocation8] sm:$0xf]
        %v536 = vld [vmem:[#allocation8 + $0x4] sm:$0xf]
        %v537 = vld [vmem:[#allocation8 + $0x8] sm:$0xf]
        %v538 = vld [vmem:[#allocation8 + $0xc] sm:$0xf]
        %v539 = vld [vmem:[#allocation8 + $0x10] sm:$0xf]
        %v540 = vld [vmem:[#allocation8 + $0x14] sm:$0xf]
        %v541 = vld [vmem:[#allocation8 + $0x18] sm:$0xf]
        %v542 = vld [vmem:[#allocation8 + $0x1c] sm:$0xf]
        %v543 = vld [vmem:[#allocation8 + $0x20] sm:$0xf]
        %v544 = vld [vmem:[#allocation8 + $0x24] sm:$0xf]
        %v545 = vld [vmem:[#allocation8 + $0x28] sm:$0xf]
        %v546 = vld [vmem:[#allocation8 + $0x2c] sm:$0xf]
        %v547 = vld [vmem:[#allocation8 + $0x30] sm:$0xf]
        %v548 = vld [vmem:[#allocation8 + $0x34] sm:$0xf]
        %v549 = vld [vmem:[#allocation8 + $0x38] sm:$0xf]
        %v550 = vld [vmem:[#allocation8 + $0x3c] sm:$0xf]
        %v551 = vld [vmem:[%s6] sm:$0x1]
        %v553 = vlaneseq
        %v554 = vshrl.u32 %v553, 7
        %v555 = vsub.s32 0, %v554
        %v556 = vrot.slane %v551, %v555
        %v574 = vunpack.c.l.b16 %v535
        %v575 = vunpack.c.l.b16 %v536
        %v576 = vunpack.c.l.b16 %v537
        %v577 = vunpack.c.l.b16 %v538
        %v578 = vunpack.c.l.b16 %v539
        %v579 = vunpack.c.l.b16 %v540
        %v580 = vunpack.c.l.b16 %v541
        %v581 = vunpack.c.l.b16 %v542
        %v582 = vunpack.c.l.b16 %v543
        %v583 = vunpack.c.l.b16 %v544
        %v584 = vunpack.c.l.b16 %v545
        %v585 = vunpack.c.l.b16 %v546
        %v586 = vunpack.c.l.b16 %v547
        %v587 = vunpack.c.l.b16 %v548
        %v588 = vunpack.c.l.b16 %v549
        %v589 = vunpack.c.l.b16 %v550
        %v590 = vpack.c.b16 %v575, %v574
        %v591 = vpack.c.b16 %v577, %v576
        %v592 = vpack.c.b16 %v579, %v578
        %v593 = vpack.c.b16 %v581, %v580
        %v594 = vpack.c.b16 %v583, %v582
        %v595 = vpack.c.b16 %v585, %v584
        %v596 = vpack.c.b16 %v587, %v586
        %v597 = vpack.c.b16 %v589, %v588
        %606 = vmatprep.subr.bf16.mxu0 0
        %607 = vmatpush1.bf16.msra.mxu0 %v590
        %608 = vmatprep.subr.bf16.mxu0 0
        %609 = vmatpush1.bf16.msra.mxu0 %v591
        %610 = vmatprep.subr.bf16.mxu0 0
        %611 = vmatpush1.bf16.msra.mxu0 %v592
        %612 = vmatprep.subr.bf16.mxu0 0
        %613 = vmatpush1.bf16.msra.mxu0 %v593
        %614 = vmatprep.subr.bf16.mxu0 0
        %615 = vmatpush1.bf16.msra.mxu0 %v594
        %616 = vmatprep.subr.bf16.mxu0 0
        %617 = vmatpush1.bf16.msra.mxu0 %v595
        %618 = vmatprep.subr.bf16.mxu0 0
        %619 = vmatpush1.bf16.msra.mxu0 %v596
        %620 = vmatprep.subr.bf16.mxu0 0
        %621 = vmatpush1.bf16.msra.mxu0 %v597
        %622 = vmatprep.subr.bf16.mxu0 0
        %623 = vmatpush1.bf16.msra.mxu0 0
        %624 = vmatprep.subr.bf16.mxu0 0
        %625 = vmatpush1.bf16.msra.mxu0 0
        %626 = vmatprep.subr.bf16.mxu0 0
        %627 = vmatpush1.bf16.msra.mxu0 0
        %628 = vmatprep.subr.bf16.mxu0 0
        %629 = vmatpush1.bf16.msra.mxu0 0
        %630 = vmatprep.subr.bf16.mxu0 0
        %631 = vmatpush1.bf16.msra.mxu0 0
        %632 = vmatprep.subr.bf16.mxu0 0
        %633 = vmatpush1.bf16.msra.mxu0 0
        %634 = vmatprep.subr.bf16.mxu0 0
        %635 = vmatpush1.bf16.msra.mxu0 0
        %636 = vmatprep.subr.bf16.mxu0 0
        %637 = vmatpush1.bf16.msra.mxu0 0
        %638 = vmatprep.mubr.bf16.mxu0 0
        %639 = vmatmul.mubr.bf16.gmra.mrb[0].mxu0 %v534
        %v640 = vpop.f32.mrb[0].mxu0
        %v641 = vadd.f32 %v556, %v640
        %v642 = vpop.f32.mrb[0].mxu0
        %v643 = vpop.f32.mrb[0].mxu0
        %v644 = vpop.f32.mrb[0].mxu0
        %645 = vdwg.mxu0
        %646 = vst [vmem:[%s337] sm:$0xff] %v641
        %s647 = sand.u32 %s186, 1
        %s648 = scalar_lea.sflag [#allocation4], %s647
        %s649 = sand.u32 %s186, 1
        %s650 = smul.addr %s649, 8
        %s651 = scalar_lea.vmem [#allocation10], %s650
        // Predicated region
        $region65: #{tpu_custom_call.1} parent=47 // pred_check
          %p652 = pneg %p196
        $region66: #{tpu_custom_call.1} parent=47 // pred_check_branch
          %654 = sbr.rel (%p652) target = $region68
        $region67: #{tpu_custom_call.1} parent=47 // pred_region
          %s656 = ssub.s32 128, 128
          %657 = vsyncadd %s648, %s656
          %s658 = smul.addr %s26, 128
          %s659 = scalar_lea.hbm %s7, %s658
          %s661 = sshll.u32 %s651, 4
          %s662 = int_to_ptr.vmem [resolvable:$true] %s661
          %664 = dma.vmem_to_hbm [thread:$0]  %s662, 128, %s659, %s648
        $region68: #{tpu_custom_call.1} parent=47 // pred_fallthru
          _
      $region48: #{tpu_custom_call.1} parent=5 // pred_fallthru
        _
      %p665 = scmp.le.s32.totalorder 2, %s21
      // Predicated region
      $region69: #{tpu_custom_call.1} parent=5 // pred_check
        %p666 = pneg %p665
      $region70: #{tpu_custom_call.1} parent=5 // pred_check_branch
        %668 = sbr.rel (%p666) target = $region72
      $region71: #{tpu_custom_call.1} parent=5 // pred_region
        %s669 = ssub.s32 %s21, 2
        // Predicated region
        $region73: #{tpu_custom_call.1} parent=71 // pred_check
          %p670 = pneg %p202
        $region74: #{tpu_custom_call.1} parent=71 // pred_check_branch
          %672 = sbr.rel (%p670) target = $region76
        $region75: #{tpu_custom_call.1} parent=71 // pred_region
          %s673 = sand.u32 %s187, 1
          %s674 = scalar_lea.sflag [#allocation4], %s673
          %s675 = sand.u32 %s187, 1
          %s676 = smul.addr %s675, 8
          %s677 = scalar_lea.vmem [#allocation10], %s676
          %678 = dma.done %s674, 128
        $region76: #{tpu_custom_call.1} parent=71 // pred_fallthru
          _
      $region72: #{tpu_custom_call.1} parent=5 // pred_fallthru
        _
    $region6: #{tpu_custom_call.1} parent=1 // loop_footer
      %s25 = sadd.s32 1, %s21
    $region7: #{tpu_custom_call.1} parent=1 // loop_footer_branch
      %20 = sbr.rel target = $region3
    $region8: #{tpu_custom_call.1} parent=1 // loop_exit
      _
    %679 = vsyncpa [#allocation3], 1
    %s680 = scalar_lea.sflag [#allocation3], 1
    %681 = vsyncpa %s680, 1
    %682 = vsyncpa [#allocation6], 1
    %683 = vsyncpa [#allocation9], 1
    %684 = vsyncpa [#allocation4], 1
    %s685 = scalar_lea.sflag [#allocation4], 1
    %686 = vsyncpa %s685, 1

</llo_original>
